<compile_context>
chip_gen: v5e
topology: v5e:2x2
jax: 0.10.0
libtpu: 0.0.40
codegen_flags: <defaults>
</compile_context>

<pallas_src>
import functools
import math

import jax
import jax.numpy as jnp
import numpy as np
from jax import lax
from jax.experimental import pallas as pl
from jax.experimental.pallas import tpu as pltpu


def _round_up(v, m):
    return (v + m - 1) // m * m


# ----------------------------------------------------------------------------
# Pallas kernel: Bb batch elements per grid step, one MXU matmul each
# ----------------------------------------------------------------------------
def _cog_conv_kernel(dyn_ref, x_ref, out_ref, xf_ref, col_ref, *,
                     Bb, k, C, C_pad, H, W, padding, Wp, Nflat_pad):
    # dyn_ref : (Bb, O, k*k*C_pad)   gated dynamic weights, col = (i*k+j)*C_pad + c
    # x_ref   : (Bb, C, H*W)         lane-dense unpadded input block
    # out_ref : (Bb, O, Nflat_pad)   lane-dense flat output rows
    # xf_ref  : (C_pad, FLAT)        VMEM scratch: zero-padded flattened input
    # col_ref : (k*k*C_pad, Nflat_pad) VMEM scratch: im2col slab

    # Zero the flat slab once per grid step: the padding border, the trailing
    # slack and the padded channel rows (c >= C) stay zero across all Bb inner
    # iterations; the interior C x H x W region is overwritten per element.
    # With C_pad sublanes and a 128-multiple FLAT this is a handful of
    # unmasked full-tile stores.
    # TODO(synk): border-only zero fill for large C*Hp*Wp inputs.
    xf_ref[...] = jnp.zeros_like(xf_ref)

    def body(b, carry):
        xb = x_ref[b]                                          # (C, H*W)
        # zero-pad this element into the flat slab, row by row
        for h in range(H):
            off = (h + padding) * Wp + padding
            xf_ref[:C, off:off + W] = xb[:, h * W:(h + 1) * W].astype(xf_ref.dtype)
        # im2col: for tap (i, j) the window over ALL output rows at the full
        # padded width Wp is one contiguous flat slice starting at i*Wp + j.
        # Destination rows [ij*C_pad, (ij+1)*C_pad) are whole 8-sublane groups
        # and Nflat_pad is a 128-multiple -> unmasked dense stores.
        for i in range(k):
            for j in range(k):
                ij = i * k + j
                off = i * Wp + j
                col_ref[ij * C_pad:(ij + 1) * C_pad, :] = xf_ref[:, off:off + Nflat_pad]
        # single lane-dense MXU matmul, f32 accumulation, lane-dense store
        out_ref[b] = jnp.dot(dyn_ref[b], col_ref[...],
                             preferred_element_type=jnp.float32
                             ).astype(out_ref.dtype)
        return carry

    lax.fori_loop(0, Bb, body, 0, unroll=True)


# ----------------------------------------------------------------------------
# Wrapper: CWFF + cognitive-weight generation glue in JAX, conv in Pallas
# ----------------------------------------------------------------------------
def cog_conv2d_pallas(x, params, *, kernel_size, stride=1, padding=0,
                      dilation=1, groups=1, in_chunk=4,
                      use_bf16_matmul=True, batch_block=8):
    # TODO(synk): kernel covers stride=1, dilation=1, groups=1 (the module's
    # default/example configuration); general stride/dilation/groups would need
    # strided window slices and a grouped grid axis.
    assert stride == 1 and dilation == 1 and groups == 1

    B, C, H, W = x.shape
    O, Cg, k, _ = params["weight"].shape          # Cg == C // groups == C
    assert k == kernel_size and Cg == C
    Q = in_chunk
    KK = k * k
    Hp, Wp = H + 2 * padding, W + 2 * padding
    Hout, Wout = Hp - k + 1, Wp - k + 1

    # (8,128)/MXU-friendly padded sizes.
    C_pad = _round_up(Cg, 8)                  # sublane-aligned slab channel stride
    Nflat = Hout * Wp                         # true flat output width
    Nflat_pad = _round_up(Nflat, 256)         # full MXU passes on v6e/v7x, 128-mult for v5e
    # flat slab length: furthest tap slice starts at (k-1)*(Wp+1) and reads
    # Nflat_pad columns; round to whole lane tiles.
    FLAT = _round_up((k - 1) * (Wp + 1) + Nflat_pad, 128)

    # --- CWFF (squeeze-excite style): avgpool -> 1x1 conv -> relu -> 1x1 conv
    pooled = x.mean(axis=(2, 3))                                       # (B, C)
    hmid = jax.nn.relu(pooled @ params["fc1_w"].T)                     # (B, C)
    kvec = hmid @ params["fc2_w"].T + params["fc2_b"]                  # (B, Q*C), ch = c*Q + q
    kmat = kvec.reshape(B, Cg, Q)                                      # (B, C, Q)

    # --- gated dynamic weights for all batch elements (tiny; one fused XLA op)
    # flattened-column layout: col = (i*k + j)*C_pad + c, matching the slab;
    # padded channel columns (c >= C) are zero.
    cogw3 = params["cog_weight"].reshape(O, Q, KK)
    raw = jnp.einsum("bcq,oqk->bokc", kmat, cogw3)                     # (B, O, KK, C)
    w4 = params["weight"].transpose(0, 2, 3, 1).reshape(1, O, KK, Cg)
    dyn4 = jax.nn.sigmoid(raw) * w4                                    # (B, O, KK, C)
    if C_pad > Cg:
        dyn4 = jnp.pad(dyn4, ((0, 0), (0, 0), (0, 0), (0, C_pad - Cg)))
    mxu_dtype = jnp.bfloat16 if use_bf16_matmul else x.dtype
    dyn = dyn4.reshape(B, O, KK * C_pad).astype(mxu_dtype)

    # lane-dense input view (free reshape): last dim H*W instead of W=16 lanes
    x_flat = x.reshape(B, Cg, H * W)

    # batch blocking: Bb elements per grid step (largest divisor of B <= cap)
    Bb = 1
    for cand in range(min(B, batch_block), 0, -1):
        if B % cand == 0:
            Bb = cand
            break

    kern = functools.partial(_cog_conv_kernel, Bb=Bb, k=k, C=Cg, C_pad=C_pad,
                             H=H, W=W, padding=padding, Wp=Wp,
                             Nflat_pad=Nflat_pad)

    isz = jnp.dtype(x.dtype).itemsize
    msz = jnp.dtype(mxu_dtype).itemsize
    # flops intentionally count the padded / wrapped columns: the MXU really
    # computes them (they are sliced off in the wrapper).
    flops = 2 * B * O * KK * C_pad * Nflat_pad
    bytes_accessed = (B * O * KK * C_pad * msz + B * Cg * H * W * isz
                      + B * O * Nflat_pad * isz)

    # VMEM budget: double-buffered in/out blocks + the two scratches, with 4x
    # headroom, floored at the 32 MiB default scoped limit and capped
    # generation-aware at ~75% of physical VMEM (v7x has only 64 MiB per TC).
    vmem_est = (2 * Bb * O * KK * C_pad * msz + 2 * Bb * Cg * H * W * isz
                + 2 * Bb * O * Nflat_pad * isz
                + (C_pad * FLAT + KK * C_pad * Nflat_pad) * msz)
    try:
        phys = getattr(pltpu.get_tpu_info(), "vmem_capacity_bytes", None)
        cap = int(0.75 * phys) if phys else 48 * 2 ** 20
    except Exception:
        cap = 48 * 2 ** 20
    vmem_limit = int(min(cap, max(32 * 2 ** 20, 4 * vmem_est)))
    # TODO(synk): for large C*H*W add a row-band spatial grid axis with a
    # (k-1)-row halo so per-step slabs fit v7x's 64 MiB VMEM.

    out_flat = pl.pallas_call(
        kern,
        out_shape=jax.ShapeDtypeStruct((B, O, Nflat_pad), x.dtype),
        grid=(B // Bb,),
        in_specs=[
            pl.BlockSpec((Bb, O, KK * C_pad), lambda g: (g, 0, 0)),
            pl.BlockSpec((Bb, Cg, H * W), lambda g: (g, 0, 0)),
        ],
        out_specs=pl.BlockSpec((Bb, O, Nflat_pad), lambda g: (g, 0, 0)),
        scratch_shapes=[
            pltpu.VMEM((C_pad, FLAT), mxu_dtype),            # flat padded input
            pltpu.VMEM((KK * C_pad, Nflat_pad), mxu_dtype),  # im2col slab
        ],
        compiler_params=pltpu.CompilerParams(
            dimension_semantics=("parallel",),
            vmem_limit_bytes=vmem_limit),
        cost_estimate=pl.CostEstimate(flops=flops, transcendentals=0,
                                      bytes_accessed=bytes_accessed),
    )(dyn, x_flat)

    # drop padded columns, then the (k-1) wrapped columns of each output row
    out = out_flat[:, :, :Nflat].reshape(B, O, Hout, Wp)[:, :, :, :Wout]
    return out


# ----------------------------------------------------------------------------
# Pure-JAX reference (mirrors the PyTorch forward) for validation
# ----------------------------------------------------------------------------
def reference_forward(x, params, *, kernel_size, padding, in_chunk):
    B, C, H, W = x.shape
    O = params["weight"].shape[0]
    k = kernel_size
    KK = k * k

    pooled = x.mean(axis=(2, 3))
    h = jax.nn.relu(pooled @ params["fc1_w"].T)
    kvec = h @ params["fc2_w"].T + params["fc2_b"]                      # (B, Q*C)

    kernel = kvec.reshape(B * C, in_chunk, 1, 1)
    cw = jax.lax.conv_general_dilated(
        params["cog_weight"], kernel, window_strides=(1, 1), padding="VALID",
        dimension_numbers=("NCHW", "OIHW", "NCHW"),
        precision=jax.lax.Precision.HIGHEST)                            # (O, B*C, k, k)
    cw = cw.reshape(O, B, C * KK).transpose(1, 0, 2)                    # (B, O, C*KK)
    cw = jax.nn.sigmoid(cw) * params["weight"].reshape(1, O, C * KK)
    cw = cw.reshape(B * O, C, k, k)

    xr = x.reshape(1, B * C, H, W)
    out = jax.lax.conv_general_dilated(
        xr, cw, window_strides=(1, 1),
        padding=[(padding, padding), (padding, padding)],
        dimension_numbers=("NCHW", "OIHW", "NCHW"),
        feature_group_count=B,
        precision=jax.lax.Precision.HIGHEST)                            # groups = 1 * B
    return out.reshape(B, O, out.shape[-2], out.shape[-1])


# ----------------------------------------------------------------------------
if __name__ == "__main__":
    B, C, H, W = 2, 4, 16, 16      # x: (B, in_planes, H, W)
    O, k, Q = 8, 3, 4              # out_planes, kernel_size, in_chunk
    padding = 1

    keys = jax.random.split(jax.random.PRNGKey(0), 6)
    x = jax.random.normal(keys[0], (B, C, H, W), jnp.float32)

    gain = math.sqrt(2.0)
    params = {
        # CWFF fc1: Conv2d(C, C, 1, bias=False), kaiming fan_out relu
        "fc1_w": jax.random.normal(keys[1], (C, C), jnp.float32) * math.sqrt(2.0 / C),
        # CWFF fc2: Conv2d(C, Q*C, 1, bias=True), kaiming fan_out relu
        "fc2_w": jax.random.normal(keys[2], (Q * C, C), jnp.float32) * math.sqrt(2.0 / (Q * C)),
        "fc2_b": jnp.zeros((Q * C,), jnp.float32),
        # cog_weight: randn(O, Q, k, k) * gain * (Q*k*k)^-0.5
        "cog_weight": jax.random.normal(keys[3], (O, Q, k, k), jnp.float32)
                      * (gain * (Q * k * k) ** -0.5),
        # weight: randn(O, C, k, k) * gain * (C*k*k)^-0.5
        "weight": jax.random.normal(keys[4], (O, C, k, k), jnp.float32)
                  * (gain * (C * k * k) ** -0.5),
    }

    ref = reference_forward(x, params, kernel_size=k, padding=padding, in_chunk=Q)

    # default path: bf16 MXU operands, f32 accumulation (looser tolerance is
    # precision-only; layout/indexing bugs would produce O(1) errors)
    out = cog_conv2d_pallas(x, params, kernel_size=k, stride=1, padding=padding,
                            dilation=1, groups=1, in_chunk=Q)
    out = jax.block_until_ready(out)
    assert out.shape == (B, O, H, W), out.shape
    np.testing.assert_allclose(np.asarray(out), np.asarray(ref), rtol=5e-2, atol=5e-2)

    # f32-operand path: tight tolerance validates the layout/indexing exactly
    out32 = cog_conv2d_pallas(x, params, kernel_size=k, stride=1, padding=padding,
                              dilation=1, groups=1, in_chunk=Q,
                              use_bf16_matmul=False)
    out32 = jax.block_until_ready(out32)
    np.testing.assert_allclose(np.asarray(out32), np.asarray(ref), rtol=5e-3, atol=5e-3)

    print("KERNEL_OK")
</pallas_src>

<mosaic_0001>
module attributes {stable_mosaic.version = 11 : i64} {
  func.func @_cog_conv_kernel(%arg0: i32, %arg1: memref<2x8x72xbf16, #tpu.memory_space<vmem>>, %arg2: memref<2x4x256xf32, #tpu.memory_space<vmem>>, %arg3: memref<2x8x512xf32, #tpu.memory_space<vmem>>, %arg4: memref<8x640xbf16, #tpu.memory_space<vmem>>, %arg5: memref<72x512xbf16, #tpu.memory_space<vmem>>) attributes {dimension_semantics = [#tpu.dimension_semantics<parallel>], iteration_bounds = array<i64: 1>, scalar_prefetch = 0 : i64, scratch_operands = 2 : i64, tpu.core_type = #tpu.core_type<tc>, window_params = [{transform_indices = @transform_0, window_bounds = array<i64: 2, 8, 72>}, {transform_indices = @transform_1, window_bounds = array<i64: 2, 4, 256>}, {transform_indices = @transform_2, window_bounds = array<i64: 2, 8, 512>}]} {
    %cst = arith.constant 0.000000e+00 : bf16
    %0 = vector.broadcast %cst : bf16 to vector<8x640xbf16>
    %c0 = arith.constant 0 : index
    %c0_0 = arith.constant 0 : index
    %1 = vector.load %arg4[%c0, %c0_0] : memref<8x640xbf16, #tpu.memory_space<vmem>>, vector<8x640xbf16>
    tpu.vector_store %arg4[%c0, %c0_0], %0 {strides = array<i32>} : memref<8x640xbf16, #tpu.memory_space<vmem>>, vector<8x640xbf16>,
    %c0_i32 = arith.constant 0 : i32
    %2 = arith.index_cast %c0_i32 : i32 to index
    %c0_1 = arith.constant 0 : index
    %c0_2 = arith.constant 0 : index
    %3 = vector.load %arg2[%2, %c0_1, %c0_2] : memref<2x4x256xf32, #tpu.memory_space<vmem>>, vector<1x4x256xf32>
    %4 = vector.shape_cast %3 : vector<1x4x256xf32> to vector<4x256xf32>
    %5 = vector.extract_strided_slice %4 {offsets = [0, 0], sizes = [4, 16], strides = [1, 1]} : vector<4x256xf32> to vector<4x16xf32>
    %6 = arith.truncf %5 : vector<4x16xf32> to vector<4x16xbf16>
    %c0_3 = arith.constant 0 : index
    %c19 = arith.constant 19 : index
    %7 = vector.load %arg4[%c0_3, %c19] : memref<8x640xbf16, #tpu.memory_space<vmem>>, vector<4x16xbf16>
    tpu.vector_store %arg4[%c0_3, %c19], %6 {strides = array<i32>} : memref<8x640xbf16, #tpu.memory_space<vmem>>, vector<4x16xbf16>,
    %8 = vector.extract_strided_slice %4 {offsets = [0, 16], sizes = [4, 16], strides = [1, 1]} : vector<4x256xf32> to vector<4x16xf32>
    %9 = arith.truncf %8 : vector<4x16xf32> to vector<4x16xbf16>
    %c0_4 = arith.constant 0 : index
    %c37 = arith.constant 37 : index
    %10 = vector.load %arg4[%c0_4, %c37] : memref<8x640xbf16, #tpu.memory_space<vmem>>, vector<4x16xbf16>
    tpu.vector_store %arg4[%c0_4, %c37], %9 {strides = array<i32>} : memref<8x640xbf16, #tpu.memory_space<vmem>>, vector<4x16xbf16>,
    %11 = vector.extract_strided_slice %4 {offsets = [0, 32], sizes = [4, 16], strides = [1, 1]} : vector<4x256xf32> to vector<4x16xf32>
    %12 = arith.truncf %11 : vector<4x16xf32> to vector<4x16xbf16>
    %c0_5 = arith.constant 0 : index
    %c55 = arith.constant 55 : index
    %13 = vector.load %arg4[%c0_5, %c55] : memref<8x640xbf16, #tpu.memory_space<vmem>>, vector<4x16xbf16>
    tpu.vector_store %arg4[%c0_5, %c55], %12 {strides = array<i32>} : memref<8x640xbf16, #tpu.memory_space<vmem>>, vector<4x16xbf16>,
    %14 = vector.extract_strided_slice %4 {offsets = [0, 48], sizes = [4, 16], strides = [1, 1]} : vector<4x256xf32> to vector<4x16xf32>
    %15 = arith.truncf %14 : vector<4x16xf32> to vector<4x16xbf16>
    %c0_6 = arith.constant 0 : index
    %c73 = arith.constant 73 : index
    %16 = vector.load %arg4[%c0_6, %c73] : memref<8x640xbf16, #tpu.memory_space<vmem>>, vector<4x16xbf16>
    tpu.vector_store %arg4[%c0_6, %c73], %15 {strides = array<i32>} : memref<8x640xbf16, #tpu.memory_space<vmem>>, vector<4x16xbf16>,
    %17 = vector.extract_strided_slice %4 {offsets = [0, 64], sizes = [4, 16], strides = [1, 1]} : vector<4x256xf32> to vector<4x16xf32>
    %18 = arith.truncf %17 : vector<4x16xf32> to vector<4x16xbf16>
    %c0_7 = arith.constant 0 : index
    %c91 = arith.constant 91 : index
    %19 = vector.load %arg4[%c0_7, %c91] : memref<8x640xbf16, #tpu.memory_space<vmem>>, vector<4x16xbf16>
    tpu.vector_store %arg4[%c0_7, %c91], %18 {strides = array<i32>} : memref<8x640xbf16, #tpu.memory_space<vmem>>, vector<4x16xbf16>,
    %20 = vector.extract_strided_slice %4 {offsets = [0, 80], sizes = [4, 16], strides = [1, 1]} : vector<4x256xf32> to vector<4x16xf32>
    %21 = arith.truncf %20 : vector<4x16xf32> to vector<4x16xbf16>
    %c0_8 = arith.constant 0 : index
    %c109 = arith.constant 109 : index
    %22 = vector.load %arg4[%c0_8, %c109] : memref<8x640xbf16, #tpu.memory_space<vmem>>, vector<4x16xbf16>
    tpu.vector_store %arg4[%c0_8, %c109], %21 {strides = array<i32>} : memref<8x640xbf16, #tpu.memory_space<vmem>>, vector<4x16xbf16>,
    %23 = vector.extract_strided_slice %4 {offsets = [0, 96], sizes = [4, 16], strides = [1, 1]} : vector<4x256xf32> to vector<4x16xf32>
    %24 = arith.truncf %23 : vector<4x16xf32> to vector<4x16xbf16>
    %c0_9 = arith.constant 0 : index
    %c127 = arith.constant 127 : index
    %25 = vector.load %arg4[%c0_9, %c127] : memref<8x640xbf16, #tpu.memory_space<vmem>>, vector<4x16xbf16>
    tpu.vector_store %arg4[%c0_9, %c127], %24 {strides = array<i32>} : memref<8x640xbf16, #tpu.memory_space<vmem>>, vector<4x16xbf16>,
    %26 = vector.extract_strided_slice %4 {offsets = [0, 112], sizes = [4, 16], strides = [1, 1]} : vector<4x256xf32> to vector<4x16xf32>
    %27 = arith.truncf %26 : vector<4x16xf32> to vector<4x16xbf16>
    %c0_10 = arith.constant 0 : index
    %c145 = arith.constant 145 : index
    %28 = vector.load %arg4[%c0_10, %c145] : memref<8x640xbf16, #tpu.memory_space<vmem>>, vector<4x16xbf16>
    tpu.vector_store %arg4[%c0_10, %c145], %27 {strides = array<i32>} : memref<8x640xbf16, #tpu.memory_space<vmem>>, vector<4x16xbf16>,
    %29 = vector.extract_strided_slice %4 {offsets = [0, 128], sizes = [4, 16], strides = [1, 1]} : vector<4x256xf32> to vector<4x16xf32>
    %30 = arith.truncf %29 : vector<4x16xf32> to vector<4x16xbf16>
    %c0_11 = arith.constant 0 : index
    %c163 = arith.constant 163 : index
    %31 = vector.load %arg4[%c0_11, %c163] : memref<8x640xbf16, #tpu.memory_space<vmem>>, vector<4x16xbf16>
    tpu.vector_store %arg4[%c0_11, %c163], %30 {strides = array<i32>} : memref<8x640xbf16, #tpu.memory_space<vmem>>, vector<4x16xbf16>,
    %32 = vector.extract_strided_slice %4 {offsets = [0, 144], sizes = [4, 16], strides = [1, 1]} : vector<4x256xf32> to vector<4x16xf32>
    %33 = arith.truncf %32 : vector<4x16xf32> to vector<4x16xbf16>
    %c0_12 = arith.constant 0 : index
    %c181 = arith.constant 181 : index
    %34 = vector.load %arg4[%c0_12, %c181] : memref<8x640xbf16, #tpu.memory_space<vmem>>, vector<4x16xbf16>
    tpu.vector_store %arg4[%c0_12, %c181], %33 {strides = array<i32>} : memref<8x640xbf16, #tpu.memory_space<vmem>>, vector<4x16xbf16>,
    %35 = vector.extract_strided_slice %4 {offsets = [0, 160], sizes = [4, 16], strides = [1, 1]} : vector<4x256xf32> to vector<4x16xf32>
    %36 = arith.truncf %35 : vector<4x16xf32> to vector<4x16xbf16>
    %c0_13 = arith.constant 0 : index
    %c199 = arith.constant 199 : index
    %37 = vector.load %arg4[%c0_13, %c199] : memref<8x640xbf16, #tpu.memory_space<vmem>>, vector<4x16xbf16>
    tpu.vector_store %arg4[%c0_13, %c199], %36 {strides = array<i32>} : memref<8x640xbf16, #tpu.memory_space<vmem>>, vector<4x16xbf16>,
    %38 = vector.extract_strided_slice %4 {offsets = [0, 176], sizes = [4, 16], strides = [1, 1]} : vector<4x256xf32> to vector<4x16xf32>
    %39 = arith.truncf %38 : vector<4x16xf32> to vector<4x16xbf16>
    %c0_14 = arith.constant 0 : index
    %c217 = arith.constant 217 : index
    %40 = vector.load %arg4[%c0_14, %c217] : memref<8x640xbf16, #tpu.memory_space<vmem>>, vector<4x16xbf16>
    tpu.vector_store %arg4[%c0_14, %c217], %39 {strides = array<i32>} : memref<8x640xbf16, #tpu.memory_space<vmem>>, vector<4x16xbf16>,
    %41 = vector.extract_strided_slice %4 {offsets = [0, 192], sizes = [4, 16], strides = [1, 1]} : vector<4x256xf32> to vector<4x16xf32>
    %42 = arith.truncf %41 : vector<4x16xf32> to vector<4x16xbf16>
    %c0_15 = arith.constant 0 : index
    %c235 = arith.constant 235 : index
    %43 = vector.load %arg4[%c0_15, %c235] : memref<8x640xbf16, #tpu.memory_space<vmem>>, vector<4x16xbf16>
    tpu.vector_store %arg4[%c0_15, %c235], %42 {strides = array<i32>} : memref<8x640xbf16, #tpu.memory_space<vmem>>, vector<4x16xbf16>,
    %44 = vector.extract_strided_slice %4 {offsets = [0, 208], sizes = [4, 16], strides = [1, 1]} : vector<4x256xf32> to vector<4x16xf32>
    %45 = arith.truncf %44 : vector<4x16xf32> to vector<4x16xbf16>
    %c0_16 = arith.constant 0 : index
    %c253 = arith.constant 253 : index
    %46 = vector.load %arg4[%c0_16, %c253] : memref<8x640xbf16, #tpu.memory_space<vmem>>, vector<4x16xbf16>
    tpu.vector_store %arg4[%c0_16, %c253], %45 {strides = array<i32>} : memref<8x640xbf16, #tpu.memory_space<vmem>>, vector<4x16xbf16>,
    %47 = vector.extract_strided_slice %4 {offsets = [0, 224], sizes = [4, 16], strides = [1, 1]} : vector<4x256xf32> to vector<4x16xf32>
    %48 = arith.truncf %47 : vector<4x16xf32> to vector<4x16xbf16>
    %c0_17 = arith.constant 0 : index
    %c271 = arith.constant 271 : index
    %49 = vector.load %arg4[%c0_17, %c271] : memref<8x640xbf16, #tpu.memory_space<vmem>>, vector<4x16xbf16>
    tpu.vector_store %arg4[%c0_17, %c271], %48 {strides = array<i32>} : memref<8x640xbf16, #tpu.memory_space<vmem>>, vector<4x16xbf16>,
    %50 = vector.extract_strided_slice %4 {offsets = [0, 240], sizes = [4, 16], strides = [1, 1]} : vector<4x256xf32> to vector<4x16xf32>
    %51 = arith.truncf %50 : vector<4x16xf32> to vector<4x16xbf16>
    %c0_18 = arith.constant 0 : index
    %c289 = arith.constant 289 : index
    %52 = vector.load %arg4[%c0_18, %c289] : memref<8x640xbf16, #tpu.memory_space<vmem>>, vector<4x16xbf16>
    tpu.vector_store %arg4[%c0_18, %c289], %51 {strides = array<i32>} : memref<8x640xbf16, #tpu.memory_space<vmem>>, vector<4x16xbf16>,
    %c0_19 = arith.constant 0 : index
    %c0_20 = arith.constant 0 : index
    %53 = vector.load %arg4[%c0_19, %c0_20] : memref<8x640xbf16, #tpu.memory_space<vmem>>, vector<8x512xbf16>
    %c0_21 = arith.constant 0 : index
    %c0_22 = arith.constant 0 : index
    %54 = vector.load %arg5[%c0_21, %c0_22] : memref<72x512xbf16, #tpu.memory_space<vmem>>, vector<8x512xbf16>
    tpu.vector_store %arg5[%c0_21, %c0_22], %53 {strides = array<i32>} : memref<72x512xbf16, #tpu.memory_space<vmem>>, vector<8x512xbf16>,
    %c0_23 = arith.constant 0 : index
    %c1 = arith.constant 1 : index
    %55 = vector.load %arg4[%c0_23, %c1] : memref<8x640xbf16, #tpu.memory_space<vmem>>, vector<8x512xbf16>
    %c8 = arith.constant 8 : index
    %c0_24 = arith.constant 0 : index
    %56 = vector.load %arg5[%c8, %c0_24] : memref<72x512xbf16, #tpu.memory_space<vmem>>, vector<8x512xbf16>
    tpu.vector_store %arg5[%c8, %c0_24], %55 {strides = array<i32>} : memref<72x512xbf16, #tpu.memory_space<vmem>>, vector<8x512xbf16>,
    %c0_25 = arith.constant 0 : index
    %c2 = arith.constant 2 : index
    %57 = vector.load %arg4[%c0_25, %c2] : memref<8x640xbf16, #tpu.memory_space<vmem>>, vector<8x512xbf16>
    %c16 = arith.constant 16 : index
    %c0_26 = arith.constant 0 : index
    %58 = vector.load %arg5[%c16, %c0_26] : memref<72x512xbf16, #tpu.memory_space<vmem>>, vector<8x512xbf16>
    tpu.vector_store %arg5[%c16, %c0_26], %57 {strides = array<i32>} : memref<72x512xbf16, #tpu.memory_space<vmem>>, vector<8x512xbf16>,
    %c0_27 = arith.constant 0 : index
    %c18 = arith.constant 18 : index
    %59 = vector.load %arg4[%c0_27, %c18] : memref<8x640xbf16, #tpu.memory_space<vmem>>, vector<8x512xbf16>
    %c24 = arith.constant 24 : index
    %c0_28 = arith.constant 0 : index
    %60 = vector.load %arg5[%c24, %c0_28] : memref<72x512xbf16, #tpu.memory_space<vmem>>, vector<8x512xbf16>
    tpu.vector_store %arg5[%c24, %c0_28], %59 {strides = array<i32>} : memref<72x512xbf16, #tpu.memory_space<vmem>>, vector<8x512xbf16>,
    %c0_29 = arith.constant 0 : index
    %c19_30 = arith.constant 19 : index
    %61 = vector.load %arg4[%c0_29, %c19_30] : memref<8x640xbf16, #tpu.memory_space<vmem>>, vector<8x512xbf16>
    %c32 = arith.constant 32 : index
    %c0_31 = arith.constant 0 : index
    %62 = vector.load %arg5[%c32, %c0_31] : memref<72x512xbf16, #tpu.memory_space<vmem>>, vector<8x512xbf16>
    tpu.vector_store %arg5[%c32, %c0_31], %61 {strides = array<i32>} : memref<72x512xbf16, #tpu.memory_space<vmem>>, vector<8x512xbf16>,
    %c0_32 = arith.constant 0 : index
    %c20 = arith.constant 20 : index
    %63 = vector.load %arg4[%c0_32, %c20] : memref<8x640xbf16, #tpu.memory_space<vmem>>, vector<8x512xbf16>
    %c40 = arith.constant 40 : index
    %c0_33 = arith.constant 0 : index
    %64 = vector.load %arg5[%c40, %c0_33] : memref<72x512xbf16, #tpu.memory_space<vmem>>, vector<8x512xbf16>
    tpu.vector_store %arg5[%c40, %c0_33], %63 {strides = array<i32>} : memref<72x512xbf16, #tpu.memory_space<vmem>>, vector<8x512xbf16>,
    %c0_34 = arith.constant 0 : index
    %c36 = arith.constant 36 : index
    %65 = vector.load %arg4[%c0_34, %c36] : memref<8x640xbf16, #tpu.memory_space<vmem>>, vector<8x512xbf16>
    %c48 = arith.constant 48 : index
    %c0_35 = arith.constant 0 : index
    %66 = vector.load %arg5[%c48, %c0_35] : memref<72x512xbf16, #tpu.memory_space<vmem>>, vector<8x512xbf16>
    tpu.vector_store %arg5[%c48, %c0_35], %65 {strides = array<i32>} : memref<72x512xbf16, #tpu.memory_space<vmem>>, vector<8x512xbf16>,
    %c0_36 = arith.constant 0 : index
    %c37_37 = arith.constant 37 : index
    %67 = vector.load %arg4[%c0_36, %c37_37] : memref<8x640xbf16, #tpu.memory_space<vmem>>, vector<8x512xbf16>
    %c56 = arith.constant 56 : index
    %c0_38 = arith.constant 0 : index
    %68 = vector.load %arg5[%c56, %c0_38] : memref<72x512xbf16, #tpu.memory_space<vmem>>, vector<8x512xbf16>
    tpu.vector_store %arg5[%c56, %c0_38], %67 {strides = array<i32>} : memref<72x512xbf16, #tpu.memory_space<vmem>>, vector<8x512xbf16>,
    %c0_39 = arith.constant 0 : index
    %c38 = arith.constant 38 : index
    %69 = vector.load %arg4[%c0_39, %c38] : memref<8x640xbf16, #tpu.memory_space<vmem>>, vector<8x512xbf16>
    %c64 = arith.constant 64 : index
    %c0_40 = arith.constant 0 : index
    %70 = vector.load %arg5[%c64, %c0_40] : memref<72x512xbf16, #tpu.memory_space<vmem>>, vector<8x512xbf16>
    tpu.vector_store %arg5[%c64, %c0_40], %69 {strides = array<i32>} : memref<72x512xbf16, #tpu.memory_space<vmem>>, vector<8x512xbf16>,
    %71 = arith.index_cast %c0_i32 : i32 to index
    %c0_41 = arith.constant 0 : index
    %c0_42 = arith.constant 0 : index
    %72 = vector.load %arg1[%71, %c0_41, %c0_42] : memref<2x8x72xbf16, #tpu.memory_space<vmem>>, vector<1x8x72xbf16>
    %73 = vector.shape_cast %72 : vector<1x8x72xbf16> to vector<8x72xbf16>
    %c0_43 = arith.constant 0 : index
    %c0_44 = arith.constant 0 : index
    %74 = vector.load %arg5[%c0_43, %c0_44] : memref<72x512xbf16, #tpu.memory_space<vmem>>, vector<72x512xbf16>
    %cst_45 = arith.constant dense<0.000000e+00> : vector<8x512xf32>
    %75 = tpu.matmul %73, %74, %cst_45 {dimension_numbers = #tpu.dot_dimension_numbers<[1], [0], [0], [1], [0, 0, 1, 1], [], []>} : vector<8x72xbf16>, vector<72x512xbf16>, vector<8x512xf32> -> vector<8x512xf32>
    %76 = arith.index_cast %c0_i32 : i32 to index
    %c0_46 = arith.constant 0 : index
    %c0_47 = arith.constant 0 : index
    %77 = vector.load %arg3[%76, %c0_46, %c0_47] : memref<2x8x512xf32, #tpu.memory_space<vmem>>, vector<1x8x512xf32>
    %78 = vector.shape_cast %77 : vector<1x8x512xf32> to vector<8x512xf32>
    %79 = vector.shape_cast %75 : vector<8x512xf32> to vector<1x8x512xf32>
    tpu.vector_store %arg3[%76, %c0_46, %c0_47], %79 {strides = array<i32>} : memref<2x8x512xf32, #tpu.memory_space<vmem>>, vector<1x8x512xf32>,
    %c1_i32 = arith.constant 1 : i32
    %80 = arith.index_cast %c1_i32 : i32 to index
    %c0_48 = arith.constant 0 : index
    %c0_49 = arith.constant 0 : index
    %81 = vector.load %arg2[%80, %c0_48, %c0_49] : memref<2x4x256xf32, #tpu.memory_space<vmem>>, vector<1x4x256xf32>
    %82 = vector.shape_cast %81 : vector<1x4x256xf32> to vector<4x256xf32>
    %83 = vector.extract_strided_slice %82 {offsets = [0, 0], sizes = [4, 16], strides = [1, 1]} : vector<4x256xf32> to vector<4x16xf32>
    %84 = arith.truncf %83 : vector<4x16xf32> to vector<4x16xbf16>
    %c0_50 = arith.constant 0 : index
    %c19_51 = arith.constant 19 : index
    %85 = vector.load %arg4[%c0_50, %c19_51] : memref<8x640xbf16, #tpu.memory_space<vmem>>, vector<4x16xbf16>
    tpu.vector_store %arg4[%c0_50, %c19_51], %84 {strides = array<i32>} : memref<8x640xbf16, #tpu.memory_space<vmem>>, vector<4x16xbf16>,
    %86 = vector.extract_strided_slice %82 {offsets = [0, 16], sizes = [4, 16], strides = [1, 1]} : vector<4x256xf32> to vector<4x16xf32>
    %87 = arith.truncf %86 : vector<4x16xf32> to vector<4x16xbf16>
    %c0_52 = arith.constant 0 : index
    %c37_53 = arith.constant 37 : index
    %88 = vector.load %arg4[%c0_52, %c37_53] : memref<8x640xbf16, #tpu.memory_space<vmem>>, vector<4x16xbf16>
    tpu.vector_store %arg4[%c0_52, %c37_53], %87 {strides = array<i32>} : memref<8x640xbf16, #tpu.memory_space<vmem>>, vector<4x16xbf16>,
    %89 = vector.extract_strided_slice %82 {offsets = [0, 32], sizes = [4, 16], strides = [1, 1]} : vector<4x256xf32> to vector<4x16xf32>
    %90 = arith.truncf %89 : vector<4x16xf32> to vector<4x16xbf16>
    %c0_54 = arith.constant 0 : index
    %c55_55 = arith.constant 55 : index
    %91 = vector.load %arg4[%c0_54, %c55_55] : memref<8x640xbf16, #tpu.memory_space<vmem>>, vector<4x16xbf16>
    tpu.vector_store %arg4[%c0_54, %c55_55], %90 {strides = array<i32>} : memref<8x640xbf16, #tpu.memory_space<vmem>>, vector<4x16xbf16>,
    %92 = vector.extract_strided_slice %82 {offsets = [0, 48], sizes = [4, 16], strides = [1, 1]} : vector<4x256xf32> to vector<4x16xf32>
    %93 = arith.truncf %92 : vector<4x16xf32> to vector<4x16xbf16>
    %c0_56 = arith.constant 0 : index
    %c73_57 = arith.constant 73 : index
    %94 = vector.load %arg4[%c0_56, %c73_57] : memref<8x640xbf16, #tpu.memory_space<vmem>>, vector<4x16xbf16>
    tpu.vector_store %arg4[%c0_56, %c73_57], %93 {strides = array<i32>} : memref<8x640xbf16, #tpu.memory_space<vmem>>, vector<4x16xbf16>,
    %95 = vector.extract_strided_slice %82 {offsets = [0, 64], sizes = [4, 16], strides = [1, 1]} : vector<4x256xf32> to vector<4x16xf32>
    %96 = arith.truncf %95 : vector<4x16xf32> to vector<4x16xbf16>
    %c0_58 = arith.constant 0 : index
    %c91_59 = arith.constant 91 : index
    %97 = vector.load %arg4[%c0_58, %c91_59] : memref<8x640xbf16, #tpu.memory_space<vmem>>, vector<4x16xbf16>
    tpu.vector_store %arg4[%c0_58, %c91_59], %96 {strides = array<i32>} : memref<8x640xbf16, #tpu.memory_space<vmem>>, vector<4x16xbf16>,
    %98 = vector.extract_strided_slice %82 {offsets = [0, 80], sizes = [4, 16], strides = [1, 1]} : vector<4x256xf32> to vector<4x16xf32>
    %99 = arith.truncf %98 : vector<4x16xf32> to vector<4x16xbf16>
    %c0_60 = arith.constant 0 : index
    %c109_61 = arith.constant 109 : index
    %100 = vector.load %arg4[%c0_60, %c109_61] : memref<8x640xbf16, #tpu.memory_space<vmem>>, vector<4x16xbf16>
    tpu.vector_store %arg4[%c0_60, %c109_61], %99 {strides = array<i32>} : memref<8x640xbf16, #tpu.memory_space<vmem>>, vector<4x16xbf16>,
    %101 = vector.extract_strided_slice %82 {offsets = [0, 96], sizes = [4, 16], strides = [1, 1]} : vector<4x256xf32> to vector<4x16xf32>
    %102 = arith.truncf %101 : vector<4x16xf32> to vector<4x16xbf16>
    %c0_62 = arith.constant 0 : index
    %c127_63 = arith.constant 127 : index
    %103 = vector.load %arg4[%c0_62, %c127_63] : memref<8x640xbf16, #tpu.memory_space<vmem>>, vector<4x16xbf16>
    tpu.vector_store %arg4[%c0_62, %c127_63], %102 {strides = array<i32>} : memref<8x640xbf16, #tpu.memory_space<vmem>>, vector<4x16xbf16>,
    %104 = vector.extract_strided_slice %82 {offsets = [0, 112], sizes = [4, 16], strides = [1, 1]} : vector<4x256xf32> to vector<4x16xf32>
    %105 = arith.truncf %104 : vector<4x16xf32> to vector<4x16xbf16>
    %c0_64 = arith.constant 0 : index
    %c145_65 = arith.constant 145 : index
    %106 = vector.load %arg4[%c0_64, %c145_65] : memref<8x640xbf16, #tpu.memory_space<vmem>>, vector<4x16xbf16>
    tpu.vector_store %arg4[%c0_64, %c145_65], %105 {strides = array<i32>} : memref<8x640xbf16, #tpu.memory_space<vmem>>, vector<4x16xbf16>,
    %107 = vector.extract_strided_slice %82 {offsets = [0, 128], sizes = [4, 16], strides = [1, 1]} : vector<4x256xf32> to vector<4x16xf32>
    %108 = arith.truncf %107 : vector<4x16xf32> to vector<4x16xbf16>
    %c0_66 = arith.constant 0 : index
    %c163_67 = arith.constant 163 : index
    %109 = vector.load %arg4[%c0_66, %c163_67] : memref<8x640xbf16, #tpu.memory_space<vmem>>, vector<4x16xbf16>
    tpu.vector_store %arg4[%c0_66, %c163_67], %108 {strides = array<i32>} : memref<8x640xbf16, #tpu.memory_space<vmem>>, vector<4x16xbf16>,
    %110 = vector.extract_strided_slice %82 {offsets = [0, 144], sizes = [4, 16], strides = [1, 1]} : vector<4x256xf32> to vector<4x16xf32>
    %111 = arith.truncf %110 : vector<4x16xf32> to vector<4x16xbf16>
    %c0_68 = arith.constant 0 : index
    %c181_69 = arith.constant 181 : index
    %112 = vector.load %arg4[%c0_68, %c181_69] : memref<8x640xbf16, #tpu.memory_space<vmem>>, vector<4x16xbf16>
    tpu.vector_store %arg4[%c0_68, %c181_69], %111 {strides = array<i32>} : memref<8x640xbf16, #tpu.memory_space<vmem>>, vector<4x16xbf16>,
    %113 = vector.extract_strided_slice %82 {offsets = [0, 160], sizes = [4, 16], strides = [1, 1]} : vector<4x256xf32> to vector<4x16xf32>
    %114 = arith.truncf %113 : vector<4x16xf32> to vector<4x16xbf16>
    %c0_70 = arith.constant 0 : index
    %c199_71 = arith.constant 199 : index
    %115 = vector.load %arg4[%c0_70, %c199_71] : memref<8x640xbf16, #tpu.memory_space<vmem>>, vector<4x16xbf16>
    tpu.vector_store %arg4[%c0_70, %c199_71], %114 {strides = array<i32>} : memref<8x640xbf16, #tpu.memory_space<vmem>>, vector<4x16xbf16>,
    %116 = vector.extract_strided_slice %82 {offsets = [0, 176], sizes = [4, 16], strides = [1, 1]} : vector<4x256xf32> to vector<4x16xf32>
    %117 = arith.truncf %116 : vector<4x16xf32> to vector<4x16xbf16>
    %c0_72 = arith.constant 0 : index
    %c217_73 = arith.constant 217 : index
    %118 = vector.load %arg4[%c0_72, %c217_73] : memref<8x640xbf16, #tpu.memory_space<vmem>>, vector<4x16xbf16>
    tpu.vector_store %arg4[%c0_72, %c217_73], %117 {strides = array<i32>} : memref<8x640xbf16, #tpu.memory_space<vmem>>, vector<4x16xbf16>,
    %119 = vector.extract_strided_slice %82 {offsets = [0, 192], sizes = [4, 16], strides = [1, 1]} : vector<4x256xf32> to vector<4x16xf32>
    %120 = arith.truncf %119 : vector<4x16xf32> to vector<4x16xbf16>
    %c0_74 = arith.constant 0 : index
    %c235_75 = arith.constant 235 : index
    %121 = vector.load %arg4[%c0_74, %c235_75] : memref<8x640xbf16, #tpu.memory_space<vmem>>, vector<4x16xbf16>
    tpu.vector_store %arg4[%c0_74, %c235_75], %120 {strides = array<i32>} : memref<8x640xbf16, #tpu.memory_space<vmem>>, vector<4x16xbf16>,
    %122 = vector.extract_strided_slice %82 {offsets = [0, 208], sizes = [4, 16], strides = [1, 1]} : vector<4x256xf32> to vector<4x16xf32>
    %123 = arith.truncf %122 : vector<4x16xf32> to vector<4x16xbf16>
    %c0_76 = arith.constant 0 : index
    %c253_77 = arith.constant 253 : index
    %124 = vector.load %arg4[%c0_76, %c253_77] : memref<8x640xbf16, #tpu.memory_space<vmem>>, vector<4x16xbf16>
    tpu.vector_store %arg4[%c0_76, %c253_77], %123 {strides = array<i32>} : memref<8x640xbf16, #tpu.memory_space<vmem>>, vector<4x16xbf16>,
    %125 = vector.extract_strided_slice %82 {offsets = [0, 224], sizes = [4, 16], strides = [1, 1]} : vector<4x256xf32> to vector<4x16xf32>
    %126 = arith.truncf %125 : vector<4x16xf32> to vector<4x16xbf16>
    %c0_78 = arith.constant 0 : index
    %c271_79 = arith.constant 271 : index
    %127 = vector.load %arg4[%c0_78, %c271_79] : memref<8x640xbf16, #tpu.memory_space<vmem>>, vector<4x16xbf16>
    tpu.vector_store %arg4[%c0_78, %c271_79], %126 {strides = array<i32>} : memref<8x640xbf16, #tpu.memory_space<vmem>>, vector<4x16xbf16>,
    %128 = vector.extract_strided_slice %82 {offsets = [0, 240], sizes = [4, 16], strides = [1, 1]} : vector<4x256xf32> to vector<4x16xf32>
    %129 = arith.truncf %128 : vector<4x16xf32> to vector<4x16xbf16>
    %c0_80 = arith.constant 0 : index
    %c289_81 = arith.constant 289 : index
    %130 = vector.load %arg4[%c0_80, %c289_81] : memref<8x640xbf16, #tpu.memory_space<vmem>>, vector<4x16xbf16>
    tpu.vector_store %arg4[%c0_80, %c289_81], %129 {strides = array<i32>} : memref<8x640xbf16, #tpu.memory_space<vmem>>, vector<4x16xbf16>,
    %c0_82 = arith.constant 0 : index
    %c0_83 = arith.constant 0 : index
    %131 = vector.load %arg4[%c0_82, %c0_83] : memref<8x640xbf16, #tpu.memory_space<vmem>>, vector<8x512xbf16>
    %c0_84 = arith.constant 0 : index
    %c0_85 = arith.constant 0 : index
    %132 = vector.load %arg5[%c0_84, %c0_85] : memref<72x512xbf16, #tpu.memory_space<vmem>>, vector<8x512xbf16>
    tpu.vector_store %arg5[%c0_84, %c0_85], %131 {strides = array<i32>} : memref<72x512xbf16, #tpu.memory_space<vmem>>, vector<8x512xbf16>,
    %c0_86 = arith.constant 0 : index
    %c1_87 = arith.constant 1 : index
    %133 = vector.load %arg4[%c0_86, %c1_87] : memref<8x640xbf16, #tpu.memory_space<vmem>>, vector<8x512xbf16>
    %c8_88 = arith.constant 8 : index
    %c0_89 = arith.constant 0 : index
    %134 = vector.load %arg5[%c8_88, %c0_89] : memref<72x512xbf16, #tpu.memory_space<vmem>>, vector<8x512xbf16>
    tpu.vector_store %arg5[%c8_88, %c0_89], %133 {strides = array<i32>} : memref<72x512xbf16, #tpu.memory_space<vmem>>, vector<8x512xbf16>,
    %c0_90 = arith.constant 0 : index
    %c2_91 = arith.constant 2 : index
    %135 = vector.load %arg4[%c0_90, %c2_91] : memref<8x640xbf16, #tpu.memory_space<vmem>>, vector<8x512xbf16>
    %c16_92 = arith.constant 16 : index
    %c0_93 = arith.constant 0 : index
    %136 = vector.load %arg5[%c16_92, %c0_93] : memref<72x512xbf16, #tpu.memory_space<vmem>>, vector<8x512xbf16>
    tpu.vector_store %arg5[%c16_92, %c0_93], %135 {strides = array<i32>} : memref<72x512xbf16, #tpu.memory_space<vmem>>, vector<8x512xbf16>,
    %c0_94 = arith.constant 0 : index
    %c18_95 = arith.constant 18 : index
    %137 = vector.load %arg4[%c0_94, %c18_95] : memref<8x640xbf16, #tpu.memory_space<vmem>>, vector<8x512xbf16>
    %c24_96 = arith.constant 24 : index
    %c0_97 = arith.constant 0 : index
    %138 = vector.load %arg5[%c24_96, %c0_97] : memref<72x512xbf16, #tpu.memory_space<vmem>>, vector<8x512xbf16>
    tpu.vector_store %arg5[%c24_96, %c0_97], %137 {strides = array<i32>} : memref<72x512xbf16, #tpu.memory_space<vmem>>, vector<8x512xbf16>,
    %c0_98 = arith.constant 0 : index
    %c19_99 = arith.constant 19 : index
    %139 = vector.load %arg4[%c0_98, %c19_99] : memref<8x640xbf16, #tpu.memory_space<vmem>>, vector<8x512xbf16>
    %c32_100 = arith.constant 32 : index
    %c0_101 = arith.constant 0 : index
    %140 = vector.load %arg5[%c32_100, %c0_101] : memref<72x512xbf16, #tpu.memory_space<vmem>>, vector<8x512xbf16>
    tpu.vector_store %arg5[%c32_100, %c0_101], %139 {strides = array<i32>} : memref<72x512xbf16, #tpu.memory_space<vmem>>, vector<8x512xbf16>,
    %c0_102 = arith.constant 0 : index
    %c20_103 = arith.constant 20 : index
    %141 = vector.load %arg4[%c0_102, %c20_103] : memref<8x640xbf16, #tpu.memory_space<vmem>>, vector<8x512xbf16>
    %c40_104 = arith.constant 40 : index
    %c0_105 = arith.constant 0 : index
    %142 = vector.load %arg5[%c40_104, %c0_105] : memref<72x512xbf16, #tpu.memory_space<vmem>>, vector<8x512xbf16>
    tpu.vector_store %arg5[%c40_104, %c0_105], %141 {strides = array<i32>} : memref<72x512xbf16, #tpu.memory_space<vmem>>, vector<8x512xbf16>,
    %c0_106 = arith.constant 0 : index
    %c36_107 = arith.constant 36 : index
    %143 = vector.load %arg4[%c0_106, %c36_107] : memref<8x640xbf16, #tpu.memory_space<vmem>>, vector<8x512xbf16>
    %c48_108 = arith.constant 48 : index
    %c0_109 = arith.constant 0 : index
    %144 = vector.load %arg5[%c48_108, %c0_109] : memref<72x512xbf16, #tpu.memory_space<vmem>>, vector<8x512xbf16>
    tpu.vector_store %arg5[%c48_108, %c0_109], %143 {strides = array<i32>} : memref<72x512xbf16, #tpu.memory_space<vmem>>, vector<8x512xbf16>,
    %c0_110 = arith.constant 0 : index
    %c37_111 = arith.constant 37 : index
    %145 = vector.load %arg4[%c0_110, %c37_111] : memref<8x640xbf16, #tpu.memory_space<vmem>>, vector<8x512xbf16>
    %c56_112 = arith.constant 56 : index
    %c0_113 = arith.constant 0 : index
    %146 = vector.load %arg5[%c56_112, %c0_113] : memref<72x512xbf16, #tpu.memory_space<vmem>>, vector<8x512xbf16>
    tpu.vector_store %arg5[%c56_112, %c0_113], %145 {strides = array<i32>} : memref<72x512xbf16, #tpu.memory_space<vmem>>, vector<8x512xbf16>,
    %c0_114 = arith.constant 0 : index
    %c38_115 = arith.constant 38 : index
    %147 = vector.load %arg4[%c0_114, %c38_115] : memref<8x640xbf16, #tpu.memory_space<vmem>>, vector<8x512xbf16>
    %c64_116 = arith.constant 64 : index
    %c0_117 = arith.constant 0 : index
    %148 = vector.load %arg5[%c64_116, %c0_117] : memref<72x512xbf16, #tpu.memory_space<vmem>>, vector<8x512xbf16>
    tpu.vector_store %arg5[%c64_116, %c0_117], %147 {strides = array<i32>} : memref<72x512xbf16, #tpu.memory_space<vmem>>, vector<8x512xbf16>,
    %149 = arith.index_cast %c1_i32 : i32 to index
    %c0_118 = arith.constant 0 : index
    %c0_119 = arith.constant 0 : index
    %150 = vector.load %arg1[%149, %c0_118, %c0_119] : memref<2x8x72xbf16, #tpu.memory_space<vmem>>, vector<1x8x72xbf16>
    %151 = vector.shape_cast %150 : vector<1x8x72xbf16> to vector<8x72xbf16>
    %c0_120 = arith.constant 0 : index
    %c0_121 = arith.constant 0 : index
    %152 = vector.load %arg5[%c0_120, %c0_121] : memref<72x512xbf16, #tpu.memory_space<vmem>>, vector<72x512xbf16>
    %cst_122 = arith.constant dense<0.000000e+00> : vector<8x512xf32>
    %153 = tpu.matmul %151, %152, %cst_122 {dimension_numbers = #tpu.dot_dimension_numbers<[1], [0], [0], [1], [0, 0, 1, 1], [], []>} : vector<8x72xbf16>, vector<72x512xbf16>, vector<8x512xf32> -> vector<8x512xf32>
    %154 = arith.index_cast %c1_i32 : i32 to index
    %c0_123 = arith.constant 0 : index
    %c0_124 = arith.constant 0 : index
    %155 = vector.load %arg3[%154, %c0_123, %c0_124] : memref<2x8x512xf32, #tpu.memory_space<vmem>>, vector<1x8x512xf32>
    %156 = vector.shape_cast %155 : vector<1x8x512xf32> to vector<8x512xf32>
    %157 = vector.shape_cast %153 : vector<8x512xf32> to vector<1x8x512xf32>
    tpu.vector_store %arg3[%154, %c0_123, %c0_124], %157 {strides = array<i32>} : memref<2x8x512xf32, #tpu.memory_space<vmem>>, vector<1x8x512xf32>,
    %c2_i32 = arith.constant 2 : i32
    return
  }
  func.func @transform_0(%arg0: i32) -> (i32, i32, i32) {
    %c0_i32 = arith.constant 0 : i32
    %c0_i32_0 = arith.constant 0 : i32
    %c0_i32_1 = arith.constant 0 : i32
    return %arg0, %c0_i32, %c0_i32_0 : i32, i32, i32
  }
  func.func @transform_1(%arg0: i32) -> (i32, i32, i32) {
    %c0_i32 = arith.constant 0 : i32
    %c0_i32_0 = arith.constant 0 : i32
    %c0_i32_1 = arith.constant 0 : i32
    return %arg0, %c0_i32, %c0_i32_0 : i32, i32, i32
  }
  func.func @transform_2(%arg0: i32) -> (i32, i32, i32) {
    %c0_i32 = arith.constant 0 : i32
    %c0_i32_0 = arith.constant 0 : i32
    %c0_i32_1 = arith.constant 0 : i32
    return %arg0, %c0_i32, %c0_i32_0 : i32, i32, i32
  }
}

</mosaic_0001>

<llo_original>
// kernel: tpu_custom_call.1
$region0: #{tpu_custom_call.1}
  #allocation0 [shape = 'u32[]', space=smem, size = 0x4, offset = 0x4, fixed_abs, tag = 'smem constant byte address 0x4 - core index']
  #allocation1 [shape = 'u32[72,128]{1,0:T(1,128)}', space=vmem, size = 0x9000, scoped, tag = 'internal scratch']
  #allocation2 [shape = 'bf16[8,640]{1,0:T(8,128)(2,1)}', space=vmem, size = 0x2800, scoped, tag = 'scratch operand']
  #allocation3 [shape = 'bf16[72,512]{1,0:T(8,128)(2,1)}', space=vmem, size = 0x12000, scoped, tag = 'scratch operand']
  %s0 = inlined_call_operand.hbm [shape: bf16[2,8,72], index: 0, kind: input, shape index: {}]
  %s1 = inlined_call_operand.hbm [shape: f32[2,4,256], index: 1, kind: input, shape index: {}]
  %s2 = inlined_call_operand.hbm [shape: f32[2,8,512], index: 2, kind: output, shape index: {}]
  %s3 = sld [smem:[#allocation0]]
  $region26: #{tpu_custom_call.1} parent=0
    _
  %s5 = ssub.s32 1, %s3
  %s6 = scalar_select 0, %s5, %s3
  $region1: #{tpu_custom_call.1} parent=0
    #allocation4 [shape = 'u8[4096]{0}', space=vmem, size = 0x1000, scoped, tag = 'input window, operand 0, single buffered']
    #allocation5 [shape = 's32[1]{0}', space=sflag, size = 0x4, scoped, tag = 'scoped memory for tpu_custom_call.1']
    #allocation6 [shape = 's32[1]{0}', space=sflag, size = 0x4, scoped, tag = 'scoped memory for tpu_custom_call.1']
    #allocation7 [shape = 'u8[8192]{0}', space=vmem, size = 0x2000, scoped, tag = 'input window, operand 1, single buffered']
    #allocation8 [shape = 's32[1]{0}', space=sflag, size = 0x4, scoped, tag = 'scoped memory for tpu_custom_call.1']
    #allocation9 [shape = 'u8[32768]{0}', space=vmem, size = 0x8000, scoped, tag = 'output window, operand 0, single buffered']
    %7 = vsyncpa [#allocation5], 0
    %8 = vsyncpa [#allocation8], 0
    %9 = vsyncpa [#allocation6], 0
    // Predicated region
    $region2: #{tpu_custom_call.1} parent=1 // pred_check
      _
    $region3: #{tpu_custom_call.1} parent=1 // pred_check_branch
      %11 = sbr.rel (0) target = $region5
    $region4: #{tpu_custom_call.1} parent=1 // pred_region
      %13 = vsyncadd [#allocation5], 0
      %s14 = sshll.u32 %s0, 4
      %s15 = int_to_ptr.hbm [resolvable:$true] %s14
      %s16 = sshll.u32 [#allocation4], 4
      %s17 = int_to_ptr.vmem [resolvable:$true] %s16
      %22 = dma.hbm_to_vmem [thread:$0]  %s15, 128, %s17, [#allocation5], 64, 64, 4
    $region5: #{tpu_custom_call.1} parent=1 // pred_fallthru
      _
    // Predicated region
    $region6: #{tpu_custom_call.1} parent=1 // pred_check
      _
    $region7: #{tpu_custom_call.1} parent=1 // pred_check_branch
      %24 = sbr.rel (0) target = $region9
    $region8: #{tpu_custom_call.1} parent=1 // pred_region
      %26 = vsyncadd [#allocation8], 0
      %s27 = sshll.u32 %s1, 4
      %s28 = int_to_ptr.hbm [resolvable:$true] %s27
      %s29 = sshll.u32 [#allocation7], 4
      %s30 = int_to_ptr.vmem [resolvable:$true] %s29
      %35 = dma.hbm_to_vmem [thread:$0]  %s28, 256, %s30, [#allocation8], 128, 128, 8
    $region9: #{tpu_custom_call.1} parent=1 // pred_fallthru
      _
    // Predicated region
    $region10: #{tpu_custom_call.1} parent=1 // pred_check
      _
    $region11: #{tpu_custom_call.1} parent=1 // pred_check_branch
      %37 = sbr.rel (0) target = $region13
    $region12: #{tpu_custom_call.1} parent=1 // pred_region
      %39 = dma.done [#allocation5], 128
    $region13: #{tpu_custom_call.1} parent=1 // pred_fallthru
      _
    // Predicated region
    $region14: #{tpu_custom_call.1} parent=1 // pred_check
      _
    $region15: #{tpu_custom_call.1} parent=1 // pred_check_branch
      %41 = sbr.rel (0) target = $region17
    $region16: #{tpu_custom_call.1} parent=1 // pred_region
      %43 = dma.done [#allocation8], 256
    $region17: #{tpu_custom_call.1} parent=1 // pred_fallthru
      _
    %45 = vst [vmem:[#allocation2] sm:$0xff] 0
    %46 = vst [vmem:[#allocation2 + $0x8] sm:$0xff] 0
    %47 = vst [vmem:[#allocation2 + $0x10] sm:$0xf] 0
    %v48 = vld [vmem:[#allocation7] sm:$0xff]
    %v49 = vpack.c.bf16 %v48, %v48
    %51 = vrot.lane.b32.xlu0 %v49, 19
    %v52 = vpop.permute.xlu0 %51
    %vm54 = vcmask 279704
    %55 = vst.msk [vmem:[#allocation2] sm:$0x3] %vm54, %v52
    %56 = vrot.lane.b32.xlu0 %v49, 21
    %v57 = vpop.permute.xlu0 %56
    %vm59 = vcmask 427304
    %60 = vst.msk [vmem:[#allocation2] sm:$0x3] %vm59, %v57
    %61 = vrot.lane.b32.xlu0 %v49, 23
    %v62 = vpop.permute.xlu0 %61
    %vm64 = vcmask 574904
    %65 = vst.msk [vmem:[#allocation2] sm:$0x3] %vm64, %v62
    %66 = vrot.lane.b32.xlu0 %v49, 25
    %v67 = vpop.permute.xlu0 %66
    %vm69 = vcmask 722504
    %70 = vst.msk [vmem:[#allocation2] sm:$0x3] %vm69, %v67
    %71 = vrot.lane.b32.xlu0 %v49, 27
    %v72 = vpop.permute.xlu0 %71
    %vm74 = vcmask 870104
    %75 = vst.msk [vmem:[#allocation2] sm:$0x3] %vm74, %v72
    %76 = vrot.lane.b32.xlu0 %v49, 29
    %v77 = vpop.permute.xlu0 %76
    %vm79 = vcmask 1017704
    %80 = vst.msk [vmem:[#allocation2] sm:$0x3] %vm79, %v77
    %81 = vrot.lane.b32.xlu0 %v49, 31
    %v82 = vpop.permute.xlu0 %81
    %v83 = vrot.slane %v82, 4
    %vm84 = vcmask 252928
    %v85 = vsel %vm84, %v83, %v82
    %vm87 = vcmask 1042424
    %vm88 = vcmask 119812
    %vm89 = vmor %vm88, %vm87
    %90 = vst.msk [vmem:[#allocation2] sm:$0x33] %vm89, %v85
    %91 = vrot.lane.b32.xlu0 %v49, 33
    %v92 = vpop.permute.xlu0 %91
    %vm94 = vcmask 263304
    %95 = vst.msk [vmem:[#allocation2 + $0x4] sm:$0x3] %vm94, %v92
    %97 = vst [vmem:[#allocation1] ss:$2 sm:$0xff] %v48
    %v98 = vld.sshfl [vmem:[#allocation1 + $0x8] sm:$0xff pattern:$0x75316420]
    %v100 = vpack.c.bf16 %v98, %v98
    %102 = vrot.lane.b32.xlu0 %v100, 35
    %v103 = vpop.permute.xlu0 %102
    %vm105 = vcmask 410904
    %106 = vst.msk [vmem:[#allocation2 + $0x4] sm:$0x3] %vm105, %v103
    %107 = vst [vmem:[#allocation1] ss:$2 sm:$0xff] %v48
    %v108 = vld.sshfl [vmem:[#allocation1 + $0x8] sm:$0xff pattern:$0x75316420]
    %109 = vrot.lane.b32.xlu0 %v108, 112
    %v110 = vpop.permute.xlu0 %109
    %v112 = vpack.c.bf16 %v110, %v110
    %114 = vrot.lane.b32.xlu0 %v112, 53
    %v115 = vpop.permute.xlu0 %114
    %vm117 = vcmask 558504
    %118 = vst.msk [vmem:[#allocation2 + $0x4] sm:$0x3] %vm117, %v115
    %119 = vst [vmem:[#allocation1] ss:$2 sm:$0xff] %v48
    %v120 = vld.sshfl [vmem:[#allocation1 + $0x8] sm:$0xff pattern:$0x75316420]
    %121 = vrot.lane.b32.xlu0 %v120, 96
    %v122 = vpop.permute.xlu0 %121
    %v124 = vpack.c.bf16 %v122, %v122
    %126 = vrot.lane.b32.xlu0 %v124, 71
    %v127 = vpop.permute.xlu0 %126
    %vm129 = vcmask 706104
    %130 = vst.msk [vmem:[#allocation2 + $0x4] sm:$0x3] %vm129, %v127
    %131 = vst [vmem:[#allocation1] ss:$2 sm:$0xff] %v48
    %v132 = vld.sshfl [vmem:[#allocation1 + $0x8] sm:$0xff pattern:$0x75316420]
    %133 = vrot.lane.b32.xlu0 %v132, 80
    %v134 = vpop.permute.xlu0 %133
    %v136 = vpack.c.bf16 %v134, %v134
    %138 = vrot.lane.b32.xlu0 %v136, 89
    %v139 = vpop.permute.xlu0 %138
    %vm141 = vcmask 853704
    %142 = vst.msk [vmem:[#allocation2 + $0x4] sm:$0x3] %vm141, %v139
    %143 = vst [vmem:[#allocation1] ss:$2 sm:$0xff] %v48
    %v144 = vld.sshfl [vmem:[#allocation1 + $0x8] sm:$0xff pattern:$0x75316420]
    %145 = vrot.lane.b32.xlu0 %v144, 64
    %v146 = vpop.permute.xlu0 %145
    %v148 = vpack.c.bf16 %v146, %v146
    %150 = vrot.lane.b32.xlu0 %v148, 107
    %v151 = vpop.permute.xlu0 %150
    %vm153 = vcmask 1001304
    %154 = vst.msk [vmem:[#allocation2 + $0x4] sm:$0x3] %vm153, %v151
    %155 = vst [vmem:[#allocation1] ss:$2 sm:$0xff] %v48
    %v156 = vld.sshfl [vmem:[#allocation1 + $0x8] sm:$0xff pattern:$0x75316420]
    %157 = vrot.lane.b32.xlu0 %v156, 48
    %v158 = vpop.permute.xlu0 %157
    %v160 = vpack.c.bf16 %v158, %v158
    %162 = vrot.lane.b32.xlu0 %v160, 125
    %v163 = vpop.permute.xlu0 %162
    %v164 = vrot.slane %v163, 4
    %vm165 = vcmask 1022976
    %v166 = vsel %vm165, %v164, %v163
    %vm168 = vcmask 1042408
    %vm169 = vcmask 103428
    %vm170 = vmor %vm169, %vm168
    %171 = vst.msk [vmem:[#allocation2 + $0x4] sm:$0x33] %vm170, %v166
    %172 = vst [vmem:[#allocation1] ss:$2 sm:$0xff] %v48
    %v173 = vld.sshfl [vmem:[#allocation1 + $0x8] sm:$0xff pattern:$0x75316420]
    %174 = vrot.lane.b32.xlu0 %v173, 32
    %v175 = vpop.permute.xlu0 %174
    %v177 = vpack.c.bf16 %v175, %v175
    %179 = vrot.lane.b32.xlu0 %v177, 15
    %v180 = vpop.permute.xlu0 %179
    %vm182 = vcmask 246904
    %183 = vst.msk [vmem:[#allocation2 + $0x8] sm:$0x3] %vm182, %v180
    %184 = vst [vmem:[#allocation1] ss:$2 sm:$0xff] %v48
    %v185 = vld.sshfl [vmem:[#allocation1 + $0x8] sm:$0xff pattern:$0x75316420]
    %186 = vrot.lane.b32.xlu0 %v185, 16
    %v187 = vpop.permute.xlu0 %186
    %v189 = vpack.c.bf16 %v187, %v187
    %191 = vrot.lane.b32.xlu0 %v189, 33
    %v192 = vpop.permute.xlu0 %191
    %vm194 = vcmask 394504
    %195 = vst.msk [vmem:[#allocation2 + $0x8] sm:$0x3] %vm194, %v192
    %v196 = vld [vmem:[#allocation2] sm:$0xff]
    %v197 = vld [vmem:[#allocation2 + $0x8] sm:$0xff]
    %198 = vst [vmem:[#allocation3] sm:$0xff] %v196
    %199 = vst [vmem:[#allocation3 + $0x8] sm:$0xff] %v197
    %v200 = vld [vmem:[#allocation2] sm:$0xff]
    %v201 = vld [vmem:[#allocation2 + $0x8] sm:$0xff]
    %v202 = vld [vmem:[#allocation2 + $0x10] sm:$0xf]
    %206 = vrot.lane.b32.xlu0 %v200, 127
    %v207 = vpop.permute.xlu0 %206
    %208 = vrot.lane.b32.xlu0 %v201, 127
    %v209 = vpop.permute.xlu0 %208
    %210 = vrot.lane.b32.xlu0 %v202, 127
    %v211 = vpop.permute.xlu0 %210
    %v212 = vrot.slane %v207, 4
    %v213 = vrot.slane %v209, 4
    %v214 = vrot.slane %v211, 4
    %vm215 = vcmask 1043456
    %v216 = vsel %vm215, %v212, %v213
    %vm217 = vcmask 1039360
    %v218 = vsel %vm217, %v207, %v216
    %v219 = vsel %vm215, %v213, %v214
    %v220 = vsel %vm217, %v209, %v219
    %223 = vst [vmem:[#allocation3 + $0x10] sm:$0xff] %v218
    %224 = vst [vmem:[#allocation3 + $0x18] sm:$0xff] %v220
    %v225 = vld [vmem:[#allocation2] sm:$0xff]
    %v226 = vld [vmem:[#allocation2 + $0x8] sm:$0xff]
    %v227 = vld [vmem:[#allocation2 + $0x10] sm:$0xf]
    %231 = vrot.lane.b32.xlu0 %v225, 126
    %v232 = vpop.permute.xlu0 %231
    %233 = vrot.lane.b32.xlu0 %v226, 126
    %v234 = vpop.permute.xlu0 %233
    %235 = vrot.lane.b32.xlu0 %v227, 126
    %v236 = vpop.permute.xlu0 %235
    %v237 = vrot.slane %v232, 4
    %v238 = vrot.slane %v234, 4
    %v239 = vrot.slane %v236, 4
    %v240 = vsel %vm215, %v237, %v238
    %vm241 = vcmask 1031168
    %v242 = vsel %vm241, %v232, %v240
    %v243 = vsel %vm215, %v238, %v239
    %v244 = vsel %vm241, %v234, %v243
    %247 = vst [vmem:[#allocation3 + $0x20] sm:$0xff] %v242
    %248 = vst [vmem:[#allocation3 + $0x28] sm:$0xff] %v244
    %v249 = vld [vmem:[#allocation2] sm:$0xff]
    %v250 = vld [vmem:[#allocation2 + $0x8] sm:$0xff]
    %v251 = vld [vmem:[#allocation2 + $0x10] sm:$0xf]
    %255 = vrot.lane.b32.xlu0 %v249, 110
    %v256 = vpop.permute.xlu0 %255
    %257 = vrot.lane.b32.xlu0 %v250, 110
    %v258 = vpop.permute.xlu0 %257
    %259 = vrot.lane.b32.xlu0 %v251, 110
    %v260 = vpop.permute.xlu0 %259
    %v261 = vrot.slane %v256, 4
    %v262 = vrot.slane %v258, 4
    %v263 = vrot.slane %v260, 4
    %v264 = vsel %vm215, %v261, %v262
    %vm265 = vcmask 900096
    %v266 = vsel %vm265, %v256, %v264
    %v267 = vsel %vm215, %v262, %v263
    %v268 = vsel %vm265, %v258, %v267
    %271 = vst [vmem:[#allocation3 + $0x30] sm:$0xff] %v266
    %272 = vst [vmem:[#allocation3 + $0x38] sm:$0xff] %v268
    %v273 = vld [vmem:[#allocation2] sm:$0xff]
    %v274 = vld [vmem:[#allocation2 + $0x8] sm:$0xff]
    %v275 = vld [vmem:[#allocation2 + $0x10] sm:$0xf]
    %279 = vrot.lane.b32.xlu0 %v273, 109
    %v280 = vpop.permute.xlu0 %279
    %281 = vrot.lane.b32.xlu0 %v274, 109
    %v282 = vpop.permute.xlu0 %281
    %283 = vrot.lane.b32.xlu0 %v275, 109
    %v284 = vpop.permute.xlu0 %283
    %v285 = vrot.slane %v280, 4
    %v286 = vrot.slane %v282, 4
    %v287 = vrot.slane %v284, 4
    %v288 = vsel %vm215, %v285, %v286
    %vm289 = vcmask 891904
    %v290 = vsel %vm289, %v280, %v288
    %v291 = vsel %vm215, %v286, %v287
    %v292 = vsel %vm289, %v282, %v291
    %295 = vst [vmem:[#allocation3 + $0x40] sm:$0xff] %v290
    %296 = vst [vmem:[#allocation3 + $0x48] sm:$0xff] %v292
    %v297 = vld [vmem:[#allocation2] sm:$0xff]
    %v298 = vld [vmem:[#allocation2 + $0x8] sm:$0xff]
    %v299 = vld [vmem:[#allocation2 + $0x10] sm:$0xf]
    %303 = vrot.lane.b32.xlu0 %v297, 108
    %v304 = vpop.permute.xlu0 %303
    %305 = vrot.lane.b32.xlu0 %v298, 108
    %v306 = vpop.permute.xlu0 %305
    %307 = vrot.lane.b32.xlu0 %v299, 108
    %v308 = vpop.permute.xlu0 %307
    %v309 = vrot.slane %v304, 4
    %v310 = vrot.slane %v306, 4
    %v311 = vrot.slane %v308, 4
    %v312 = vsel %vm215, %v309, %v310
    %vm313 = vcmask 883712
    %v314 = vsel %vm313, %v304, %v312
    %v315 = vsel %vm215, %v310, %v311
    %v316 = vsel %vm313, %v306, %v315
    %319 = vst [vmem:[#allocation3 + $0x50] sm:$0xff] %v314
    %320 = vst [vmem:[#allocation3 + $0x58] sm:$0xff] %v316
    %v321 = vld [vmem:[#allocation2] sm:$0xff]
    %v322 = vld [vmem:[#allocation2 + $0x8] sm:$0xff]
    %v323 = vld [vmem:[#allocation2 + $0x10] sm:$0xf]
    %327 = vrot.lane.b32.xlu0 %v321, 92
    %v328 = vpop.permute.xlu0 %327
    %329 = vrot.lane.b32.xlu0 %v322, 92
    %v330 = vpop.permute.xlu0 %329
    %331 = vrot.lane.b32.xlu0 %v323, 92
    %v332 = vpop.permute.xlu0 %331
    %v333 = vrot.slane %v328, 4
    %v334 = vrot.slane %v330, 4
    %v335 = vrot.slane %v332, 4
    %v336 = vsel %vm215, %v333, %v334
    %vm337 = vcmask 752640
    %v338 = vsel %vm337, %v328, %v336
    %v339 = vsel %vm215, %v334, %v335
    %v340 = vsel %vm337, %v330, %v339
    %343 = vst [vmem:[#allocation3 + $0x60] sm:$0xff] %v338
    %344 = vst [vmem:[#allocation3 + $0x68] sm:$0xff] %v340
    %v345 = vld [vmem:[#allocation2] sm:$0xff]
    %v346 = vld [vmem:[#allocation2 + $0x8] sm:$0xff]
    %v347 = vld [vmem:[#allocation2 + $0x10] sm:$0xf]
    %351 = vrot.lane.b32.xlu0 %v345, 91
    %v352 = vpop.permute.xlu0 %351
    %353 = vrot.lane.b32.xlu0 %v346, 91
    %v354 = vpop.permute.xlu0 %353
    %355 = vrot.lane.b32.xlu0 %v347, 91
    %v356 = vpop.permute.xlu0 %355
    %v357 = vrot.slane %v352, 4
    %v358 = vrot.slane %v354, 4
    %v359 = vrot.slane %v356, 4
    %v360 = vsel %vm215, %v357, %v358
    %vm361 = vcmask 744448
    %v362 = vsel %vm361, %v352, %v360
    %v363 = vsel %vm215, %v358, %v359
    %v364 = vsel %vm361, %v354, %v363
    %367 = vst [vmem:[#allocation3 + $0x70] sm:$0xff] %v362
    %368 = vst [vmem:[#allocation3 + $0x78] sm:$0xff] %v364
    %v369 = vld [vmem:[#allocation2] sm:$0xff]
    %v370 = vld [vmem:[#allocation2 + $0x8] sm:$0xff]
    %v371 = vld [vmem:[#allocation2 + $0x10] sm:$0xf]
    %375 = vrot.lane.b32.xlu0 %v369, 90
    %v376 = vpop.permute.xlu0 %375
    %377 = vrot.lane.b32.xlu0 %v370, 90
    %v378 = vpop.permute.xlu0 %377
    %379 = vrot.lane.b32.xlu0 %v371, 90
    %v380 = vpop.permute.xlu0 %379
    %v381 = vrot.slane %v376, 4
    %v382 = vrot.slane %v378, 4
    %v383 = vrot.slane %v380, 4
    %v384 = vsel %vm215, %v381, %v382
    %vm385 = vcmask 736256
    %v386 = vsel %vm385, %v376, %v384
    %v387 = vsel %vm215, %v382, %v383
    %v388 = vsel %vm385, %v378, %v387
    %391 = vst [vmem:[#allocation3 + $0x80] sm:$0xff] %v386
    %392 = vst [vmem:[#allocation3 + $0x88] sm:$0xff] %v388
    %v393 = vld [vmem:[#allocation4] sm:$0xf]
    %v394 = vld [vmem:[#allocation3] sm:$0xff]
    %v395 = vld [vmem:[#allocation3 + $0x8] sm:$0xff]
    %v396 = vld [vmem:[#allocation3 + $0x10] sm:$0xff]
    %v397 = vld [vmem:[#allocation3 + $0x18] sm:$0xff]
    %v398 = vld [vmem:[#allocation3 + $0x20] sm:$0xff]
    %v399 = vld [vmem:[#allocation3 + $0x28] sm:$0xff]
    %v400 = vld [vmem:[#allocation3 + $0x30] sm:$0xff]
    %v401 = vld [vmem:[#allocation3 + $0x38] sm:$0xff]
    %v402 = vld [vmem:[#allocation3 + $0x40] sm:$0xff]
    %v403 = vld [vmem:[#allocation3 + $0x48] sm:$0xff]
    %v404 = vld [vmem:[#allocation3 + $0x50] sm:$0xff]
    %v405 = vld [vmem:[#allocation3 + $0x58] sm:$0xff]
    %v406 = vld [vmem:[#allocation3 + $0x60] sm:$0xff]
    %v407 = vld [vmem:[#allocation3 + $0x68] sm:$0xff]
    %v408 = vld [vmem:[#allocation3 + $0x70] sm:$0xff]
    %v409 = vld [vmem:[#allocation3 + $0x78] sm:$0xff]
    %v410 = vld [vmem:[#allocation3 + $0x80] sm:$0xff]
    %v411 = vld [vmem:[#allocation3 + $0x88] sm:$0xff]
    %v430 = vunpack.c.l.b16 %v394
    %v431 = vunpack.c.h.b16 %v394
    %v432 = vunpack.c.l.b16 %v395
    %v433 = vunpack.c.h.b16 %v395
    %v434 = vunpack.c.l.b16 %v396
    %v435 = vunpack.c.h.b16 %v396
    %v436 = vunpack.c.l.b16 %v397
    %v437 = vunpack.c.h.b16 %v397
    %v438 = vunpack.c.l.b16 %v398
    %v439 = vunpack.c.h.b16 %v398
    %v440 = vunpack.c.l.b16 %v399
    %v441 = vunpack.c.h.b16 %v399
    %v442 = vunpack.c.l.b16 %v400
    %v443 = vunpack.c.h.b16 %v400
    %v444 = vunpack.c.l.b16 %v401
    %v445 = vunpack.c.h.b16 %v401
    %v446 = vunpack.c.l.b16 %v402
    %v447 = vunpack.c.h.b16 %v402
    %v448 = vunpack.c.l.b16 %v403
    %v449 = vunpack.c.h.b16 %v403
    %v450 = vunpack.c.l.b16 %v404
    %v451 = vunpack.c.h.b16 %v404
    %v452 = vunpack.c.l.b16 %v405
    %v453 = vunpack.c.h.b16 %v405
    %v454 = vunpack.c.l.b16 %v406
    %v455 = vunpack.c.h.b16 %v406
    %v456 = vunpack.c.l.b16 %v407
    %v457 = vunpack.c.h.b16 %v407
    %v458 = vunpack.c.l.b16 %v408
    %v459 = vunpack.c.h.b16 %v408
    %v460 = vunpack.c.l.b16 %v409
    %v461 = vunpack.c.h.b16 %v409
    %v462 = vunpack.c.l.b16 %v410
    %v463 = vunpack.c.h.b16 %v410
    %v464 = vunpack.c.l.b16 %v411
    %v465 = vunpack.c.h.b16 %v411
    %v466 = vpack.c.b16 %v434, %v430
    %v467 = vpack.c.b16 %v435, %v431
    %v468 = vpack.c.b16 %v436, %v432
    %v469 = vpack.c.b16 %v437, %v433
    %v470 = vpack.c.b16 %v442, %v438
    %v471 = vpack.c.b16 %v443, %v439
    %v472 = vpack.c.b16 %v444, %v440
    %v473 = vpack.c.b16 %v445, %v441
    %v474 = vpack.c.b16 %v450, %v446
    %v475 = vpack.c.b16 %v451, %v447
    %v476 = vpack.c.b16 %v452, %v448
    %v477 = vpack.c.b16 %v453, %v449
    %v478 = vpack.c.b16 %v458, %v454
    %v479 = vpack.c.b16 %v459, %v455
    %v480 = vpack.c.b16 %v460, %v456
    %v481 = vpack.c.b16 %v461, %v457
    %v482 = vpack.c.b16 %v462, %v462
    %v483 = vpack.c.b16 %v463, %v463
    %v484 = vpack.c.b16 %v464, %v464
    %v485 = vpack.c.b16 %v465, %v465
    %vm502 = vcmask 588800
    %v504 = vsel %vm502, %v393, 0
    %vm506 = vcmask 1043456
    %v508 = vsel %vm506, %v482, 0
    %v511 = vsel %vm506, %v483, 0
    %v514 = vsel %vm506, %v484, 0
    %v517 = vsel %vm506, %v485, 0
    %519 = vmatpush.bf16.msra.mxu0 0
    %520 = vmatpush.bf16.msra.mxu0 0
    %521 = vmatpush.bf16.msra.mxu0 0
    %522 = vmatpush.bf16.msra.mxu0 %v508
    %523 = vmatpush.bf16.msra.mxu0 %v478
    %524 = vmatpush.bf16.msra.mxu0 %v474
    %525 = vmatpush.bf16.msra.mxu0 %v470
    %526 = vmatpush.bf16.msra.mxu0 %v466
    %527 = vmatmul.bf16.gmra.mxu0 %v504
    %v528 = vpop.f32.mrf.mxu0
    %v529 = vadd.f32 0.0, %v528
    %v530 = vpop.f32.mrf.mxu0
    %531 = vdwg.mxu0
    %532 = vmatpush.bf16.msra.mxu0 0
    %533 = vmatpush.bf16.msra.mxu0 0
    %534 = vmatpush.bf16.msra.mxu0 0
    %535 = vmatpush.bf16.msra.mxu0 %v511
    %536 = vmatpush.bf16.msra.mxu0 %v479
    %537 = vmatpush.bf16.msra.mxu0 %v475
    %538 = vmatpush.bf16.msra.mxu0 %v471
    %539 = vmatpush.bf16.msra.mxu0 %v467
    %540 = vmatmul.bf16.gmra.mxu0 %v504
    %v541 = vpop.f32.mrf.mxu0
    %v542 = vadd.f32 0.0, %v541
    %v543 = vpop.f32.mrf.mxu0
    %544 = vdwg.mxu0
    %545 = vmatpush.bf16.msra.mxu0 0
    %546 = vmatpush.bf16.msra.mxu0 0
    %547 = vmatpush.bf16.msra.mxu0 0
    %548 = vmatpush.bf16.msra.mxu0 %v514
    %549 = vmatpush.bf16.msra.mxu0 %v480
    %550 = vmatpush.bf16.msra.mxu0 %v476
    %551 = vmatpush.bf16.msra.mxu0 %v472
    %552 = vmatpush.bf16.msra.mxu0 %v468
    %553 = vmatmul.bf16.gmra.mxu0 %v504
    %v554 = vpop.f32.mrf.mxu0
    %v555 = vadd.f32 0.0, %v554
    %v556 = vpop.f32.mrf.mxu0
    %557 = vdwg.mxu0
    %558 = vmatpush.bf16.msra.mxu0 0
    %559 = vmatpush.bf16.msra.mxu0 0
    %560 = vmatpush.bf16.msra.mxu0 0
    %561 = vmatpush.bf16.msra.mxu0 %v517
    %562 = vmatpush.bf16.msra.mxu0 %v481
    %563 = vmatpush.bf16.msra.mxu0 %v477
    %564 = vmatpush.bf16.msra.mxu0 %v473
    %565 = vmatpush.bf16.msra.mxu0 %v469
    %566 = vmatmul.bf16.gmra.mxu0 %v504
    %v567 = vpop.f32.mrf.mxu0
    %v568 = vadd.f32 0.0, %v567
    %v569 = vpop.f32.mrf.mxu0
    %570 = vdwg.mxu0
    %571 = vst [vmem:[#allocation9] sm:$0xff] %v529
    %572 = vst [vmem:[#allocation9 + $0x8] sm:$0xff] %v542
    %573 = vst [vmem:[#allocation9 + $0x10] sm:$0xff] %v555
    %574 = vst [vmem:[#allocation9 + $0x18] sm:$0xff] %v568
    %s575 = scalar_lea.vmem [#allocation7], 8
    %v576 = vld [vmem:[%s575] sm:$0xff]
    %v577 = vpack.c.bf16 %v576, %v576
    %579 = vrot.lane.b32.xlu0 %v577, 19
    %v580 = vpop.permute.xlu0 %579
    %582 = vst.msk [vmem:[#allocation2] sm:$0x3] %vm54, %v580
    %583 = vrot.lane.b32.xlu0 %v577, 21
    %v584 = vpop.permute.xlu0 %583
    %586 = vst.msk [vmem:[#allocation2] sm:$0x3] %vm59, %v584
    %587 = vrot.lane.b32.xlu0 %v577, 23
    %v588 = vpop.permute.xlu0 %587
    %590 = vst.msk [vmem:[#allocation2] sm:$0x3] %vm64, %v588
    %591 = vrot.lane.b32.xlu0 %v577, 25
    %v592 = vpop.permute.xlu0 %591
    %594 = vst.msk [vmem:[#allocation2] sm:$0x3] %vm69, %v592
    %595 = vrot.lane.b32.xlu0 %v577, 27
    %v596 = vpop.permute.xlu0 %595
    %598 = vst.msk [vmem:[#allocation2] sm:$0x3] %vm74, %v596
    %599 = vrot.lane.b32.xlu0 %v577, 29
    %v600 = vpop.permute.xlu0 %599
    %602 = vst.msk [vmem:[#allocation2] sm:$0x3] %vm79, %v600
    %603 = vrot.lane.b32.xlu0 %v577, 31
    %v604 = vpop.permute.xlu0 %603
    %v605 = vrot.slane %v604, 4
    %v606 = vsel %vm84, %v605, %v604
    %608 = vst.msk [vmem:[#allocation2] sm:$0x33] %vm89, %v606
    %609 = vrot.lane.b32.xlu0 %v577, 33
    %v610 = vpop.permute.xlu0 %609
    %612 = vst.msk [vmem:[#allocation2 + $0x4] sm:$0x3] %vm94, %v610
    %614 = vst [vmem:[#allocation1] ss:$2 sm:$0xff] %v576
    %v615 = vld.sshfl [vmem:[#allocation1 + $0x8] sm:$0xff pattern:$0x75316420]
    %v617 = vpack.c.bf16 %v615, %v615
    %619 = vrot.lane.b32.xlu0 %v617, 35
    %v620 = vpop.permute.xlu0 %619
    %622 = vst.msk [vmem:[#allocation2 + $0x4] sm:$0x3] %vm105, %v620
    %623 = vst [vmem:[#allocation1] ss:$2 sm:$0xff] %v576
    %v624 = vld.sshfl [vmem:[#allocation1 + $0x8] sm:$0xff pattern:$0x75316420]
    %625 = vrot.lane.b32.xlu0 %v624, 112
    %v626 = vpop.permute.xlu0 %625
    %v628 = vpack.c.bf16 %v626, %v626
    %630 = vrot.lane.b32.xlu0 %v628, 53
    %v631 = vpop.permute.xlu0 %630
    %633 = vst.msk [vmem:[#allocation2 + $0x4] sm:$0x3] %vm117, %v631
    %634 = vst [vmem:[#allocation1] ss:$2 sm:$0xff] %v576
    %v635 = vld.sshfl [vmem:[#allocation1 + $0x8] sm:$0xff pattern:$0x75316420]
    %636 = vrot.lane.b32.xlu0 %v635, 96
    %v637 = vpop.permute.xlu0 %636
    %v639 = vpack.c.bf16 %v637, %v637
    %641 = vrot.lane.b32.xlu0 %v639, 71
    %v642 = vpop.permute.xlu0 %641
    %644 = vst.msk [vmem:[#allocation2 + $0x4] sm:$0x3] %vm129, %v642
    %645 = vst [vmem:[#allocation1] ss:$2 sm:$0xff] %v576
    %v646 = vld.sshfl [vmem:[#allocation1 + $0x8] sm:$0xff pattern:$0x75316420]
    %647 = vrot.lane.b32.xlu0 %v646, 80
    %v648 = vpop.permute.xlu0 %647
    %v650 = vpack.c.bf16 %v648, %v648
    %652 = vrot.lane.b32.xlu0 %v650, 89
    %v653 = vpop.permute.xlu0 %652
    %655 = vst.msk [vmem:[#allocation2 + $0x4] sm:$0x3] %vm141, %v653
    %656 = vst [vmem:[#allocation1] ss:$2 sm:$0xff] %v576
    %v657 = vld.sshfl [vmem:[#allocation1 + $0x8] sm:$0xff pattern:$0x75316420]
    %658 = vrot.lane.b32.xlu0 %v657, 64
    %v659 = vpop.permute.xlu0 %658
    %v661 = vpack.c.bf16 %v659, %v659
    %663 = vrot.lane.b32.xlu0 %v661, 107
    %v664 = vpop.permute.xlu0 %663
    %666 = vst.msk [vmem:[#allocation2 + $0x4] sm:$0x3] %vm153, %v664
    %667 = vst [vmem:[#allocation1] ss:$2 sm:$0xff] %v576
    %v668 = vld.sshfl [vmem:[#allocation1 + $0x8] sm:$0xff pattern:$0x75316420]
    %669 = vrot.lane.b32.xlu0 %v668, 48
    %v670 = vpop.permute.xlu0 %669
    %v672 = vpack.c.bf16 %v670, %v670
    %674 = vrot.lane.b32.xlu0 %v672, 125
    %v675 = vpop.permute.xlu0 %674
    %v676 = vrot.slane %v675, 4
    %v677 = vsel %vm165, %v676, %v675
    %679 = vst.msk [vmem:[#allocation2 + $0x4] sm:$0x33] %vm170, %v677
    %680 = vst [vmem:[#allocation1] ss:$2 sm:$0xff] %v576
    %v681 = vld.sshfl [vmem:[#allocation1 + $0x8] sm:$0xff pattern:$0x75316420]
    %682 = vrot.lane.b32.xlu0 %v681, 32
    %v683 = vpop.permute.xlu0 %682
    %v685 = vpack.c.bf16 %v683, %v683
    %687 = vrot.lane.b32.xlu0 %v685, 15
    %v688 = vpop.permute.xlu0 %687
    %690 = vst.msk [vmem:[#allocation2 + $0x8] sm:$0x3] %vm182, %v688
    %691 = vst [vmem:[#allocation1] ss:$2 sm:$0xff] %v576
    %v692 = vld.sshfl [vmem:[#allocation1 + $0x8] sm:$0xff pattern:$0x75316420]
    %693 = vrot.lane.b32.xlu0 %v692, 16
    %v694 = vpop.permute.xlu0 %693
    %v696 = vpack.c.bf16 %v694, %v694
    %698 = vrot.lane.b32.xlu0 %v696, 33
    %v699 = vpop.permute.xlu0 %698
    %701 = vst.msk [vmem:[#allocation2 + $0x8] sm:$0x3] %vm194, %v699
    %v702 = vld [vmem:[#allocation2] sm:$0xff]
    %v703 = vld [vmem:[#allocation2 + $0x8] sm:$0xff]
    %704 = vst [vmem:[#allocation3] sm:$0xff] %v702
    %705 = vst [vmem:[#allocation3 + $0x8] sm:$0xff] %v703
    %v706 = vld [vmem:[#allocation2] sm:$0xff]
    %v707 = vld [vmem:[#allocation2 + $0x8] sm:$0xff]
    %v708 = vld [vmem:[#allocation2 + $0x10] sm:$0xf]
    %712 = vrot.lane.b32.xlu0 %v706, 127
    %v713 = vpop.permute.xlu0 %712
    %714 = vrot.lane.b32.xlu0 %v707, 127
    %v715 = vpop.permute.xlu0 %714
    %716 = vrot.lane.b32.xlu0 %v708, 127
    %v717 = vpop.permute.xlu0 %716
    %v718 = vrot.slane %v713, 4
    %v719 = vrot.slane %v715, 4
    %v720 = vrot.slane %v717, 4
    %v721 = vsel %vm215, %v718, %v719
    %v722 = vsel %vm217, %v713, %v721
    %v723 = vsel %vm215, %v719, %v720
    %v724 = vsel %vm217, %v715, %v723
    %727 = vst [vmem:[#allocation3 + $0x10] sm:$0xff] %v722
    %728 = vst [vmem:[#allocation3 + $0x18] sm:$0xff] %v724
    %v729 = vld [vmem:[#allocation2] sm:$0xff]
    %v730 = vld [vmem:[#allocation2 + $0x8] sm:$0xff]
    %v731 = vld [vmem:[#allocation2 + $0x10] sm:$0xf]
    %735 = vrot.lane.b32.xlu0 %v729, 126
    %v736 = vpop.permute.xlu0 %735
    %737 = vrot.lane.b32.xlu0 %v730, 126
    %v738 = vpop.permute.xlu0 %737
    %739 = vrot.lane.b32.xlu0 %v731, 126
    %v740 = vpop.permute.xlu0 %739
    %v741 = vrot.slane %v736, 4
    %v742 = vrot.slane %v738, 4
    %v743 = vrot.slane %v740, 4
    %v744 = vsel %vm215, %v741, %v742
    %v745 = vsel %vm241, %v736, %v744
    %v746 = vsel %vm215, %v742, %v743
    %v747 = vsel %vm241, %v738, %v746
    %750 = vst [vmem:[#allocation3 + $0x20] sm:$0xff] %v745
    %751 = vst [vmem:[#allocation3 + $0x28] sm:$0xff] %v747
    %v752 = vld [vmem:[#allocation2] sm:$0xff]
    %v753 = vld [vmem:[#allocation2 + $0x8] sm:$0xff]
    %v754 = vld [vmem:[#allocation2 + $0x10] sm:$0xf]
    %758 = vrot.lane.b32.xlu0 %v752, 110
    %v759 = vpop.permute.xlu0 %758
    %760 = vrot.lane.b32.xlu0 %v753, 110
    %v761 = vpop.permute.xlu0 %760
    %762 = vrot.lane.b32.xlu0 %v754, 110
    %v763 = vpop.permute.xlu0 %762
    %v764 = vrot.slane %v759, 4
    %v765 = vrot.slane %v761, 4
    %v766 = vrot.slane %v763, 4
    %v767 = vsel %vm215, %v764, %v765
    %v768 = vsel %vm265, %v759, %v767
    %v769 = vsel %vm215, %v765, %v766
    %v770 = vsel %vm265, %v761, %v769
    %773 = vst [vmem:[#allocation3 + $0x30] sm:$0xff] %v768
    %774 = vst [vmem:[#allocation3 + $0x38] sm:$0xff] %v770
    %v775 = vld [vmem:[#allocation2] sm:$0xff]
    %v776 = vld [vmem:[#allocation2 + $0x8] sm:$0xff]
    %v777 = vld [vmem:[#allocation2 + $0x10] sm:$0xf]
    %781 = vrot.lane.b32.xlu0 %v775, 109
    %v782 = vpop.permute.xlu0 %781
    %783 = vrot.lane.b32.xlu0 %v776, 109
    %v784 = vpop.permute.xlu0 %783
    %785 = vrot.lane.b32.xlu0 %v777, 109
    %v786 = vpop.permute.xlu0 %785
    %v787 = vrot.slane %v782, 4
    %v788 = vrot.slane %v784, 4
    %v789 = vrot.slane %v786, 4
    %v790 = vsel %vm215, %v787, %v788
    %v791 = vsel %vm289, %v782, %v790
    %v792 = vsel %vm215, %v788, %v789
    %v793 = vsel %vm289, %v784, %v792
    %796 = vst [vmem:[#allocation3 + $0x40] sm:$0xff] %v791
    %797 = vst [vmem:[#allocation3 + $0x48] sm:$0xff] %v793
    %v798 = vld [vmem:[#allocation2] sm:$0xff]
    %v799 = vld [vmem:[#allocation2 + $0x8] sm:$0xff]
    %v800 = vld [vmem:[#allocation2 + $0x10] sm:$0xf]
    %804 = vrot.lane.b32.xlu0 %v798, 108
    %v805 = vpop.permute.xlu0 %804
    %806 = vrot.lane.b32.xlu0 %v799, 108
    %v807 = vpop.permute.xlu0 %806
    %808 = vrot.lane.b32.xlu0 %v800, 108
    %v809 = vpop.permute.xlu0 %808
    %v810 = vrot.slane %v805, 4
    %v811 = vrot.slane %v807, 4
    %v812 = vrot.slane %v809, 4
    %v813 = vsel %vm215, %v810, %v811
    %v814 = vsel %vm313, %v805, %v813
    %v815 = vsel %vm215, %v811, %v812
    %v816 = vsel %vm313, %v807, %v815
    %819 = vst [vmem:[#allocation3 + $0x50] sm:$0xff] %v814
    %820 = vst [vmem:[#allocation3 + $0x58] sm:$0xff] %v816
    %v821 = vld [vmem:[#allocation2] sm:$0xff]
    %v822 = vld [vmem:[#allocation2 + $0x8] sm:$0xff]
    %v823 = vld [vmem:[#allocation2 + $0x10] sm:$0xf]
    %827 = vrot.lane.b32.xlu0 %v821, 92
    %v828 = vpop.permute.xlu0 %827
    %829 = vrot.lane.b32.xlu0 %v822, 92
    %v830 = vpop.permute.xlu0 %829
    %831 = vrot.lane.b32.xlu0 %v823, 92
    %v832 = vpop.permute.xlu0 %831
    %v833 = vrot.slane %v828, 4
    %v834 = vrot.slane %v830, 4
    %v835 = vrot.slane %v832, 4
    %v836 = vsel %vm215, %v833, %v834
    %v837 = vsel %vm337, %v828, %v836
    %v838 = vsel %vm215, %v834, %v835
    %v839 = vsel %vm337, %v830, %v838
    %842 = vst [vmem:[#allocation3 + $0x60] sm:$0xff] %v837
    %843 = vst [vmem:[#allocation3 + $0x68] sm:$0xff] %v839
    %v844 = vld [vmem:[#allocation2] sm:$0xff]
    %v845 = vld [vmem:[#allocation2 + $0x8] sm:$0xff]
    %v846 = vld [vmem:[#allocation2 + $0x10] sm:$0xf]
    %850 = vrot.lane.b32.xlu0 %v844, 91
    %v851 = vpop.permute.xlu0 %850
    %852 = vrot.lane.b32.xlu0 %v845, 91
    %v853 = vpop.permute.xlu0 %852
    %854 = vrot.lane.b32.xlu0 %v846, 91
    %v855 = vpop.permute.xlu0 %854
    %v856 = vrot.slane %v851, 4
    %v857 = vrot.slane %v853, 4
    %v858 = vrot.slane %v855, 4
    %v859 = vsel %vm215, %v856, %v857
    %v860 = vsel %vm361, %v851, %v859
    %v861 = vsel %vm215, %v857, %v858
    %v862 = vsel %vm361, %v853, %v861
    %865 = vst [vmem:[#allocation3 + $0x70] sm:$0xff] %v860
    %866 = vst [vmem:[#allocation3 + $0x78] sm:$0xff] %v862
    %v867 = vld [vmem:[#allocation2] sm:$0xff]
    %v868 = vld [vmem:[#allocation2 + $0x8] sm:$0xff]
    %v869 = vld [vmem:[#allocation2 + $0x10] sm:$0xf]
    %873 = vrot.lane.b32.xlu0 %v867, 90
    %v874 = vpop.permute.xlu0 %873
    %875 = vrot.lane.b32.xlu0 %v868, 90
    %v876 = vpop.permute.xlu0 %875
    %877 = vrot.lane.b32.xlu0 %v869, 90
    %v878 = vpop.permute.xlu0 %877
    %v879 = vrot.slane %v874, 4
    %v880 = vrot.slane %v876, 4
    %v881 = vrot.slane %v878, 4
    %v882 = vsel %vm215, %v879, %v880
    %v883 = vsel %vm385, %v874, %v882
    %v884 = vsel %vm215, %v880, %v881
    %v885 = vsel %vm385, %v876, %v884
    %888 = vst [vmem:[#allocation3 + $0x80] sm:$0xff] %v883
    %889 = vst [vmem:[#allocation3 + $0x88] sm:$0xff] %v885
    %s890 = scalar_lea.vmem [#allocation4], 4
    %v891 = vld [vmem:[%s890] sm:$0xf]
    %v892 = vld [vmem:[#allocation3] sm:$0xff]
    %v893 = vld [vmem:[#allocation3 + $0x8] sm:$0xff]
    %v894 = vld [vmem:[#allocation3 + $0x10] sm:$0xff]
    %v895 = vld [vmem:[#allocation3 + $0x18] sm:$0xff]
    %v896 = vld [vmem:[#allocation3 + $0x20] sm:$0xff]
    %v897 = vld [vmem:[#allocation3 + $0x28] sm:$0xff]
    %v898 = vld [vmem:[#allocation3 + $0x30] sm:$0xff]
    %v899 = vld [vmem:[#allocation3 + $0x38] sm:$0xff]
    %v900 = vld [vmem:[#allocation3 + $0x40] sm:$0xff]
    %v901 = vld [vmem:[#allocation3 + $0x48] sm:$0xff]
    %v902 = vld [vmem:[#allocation3 + $0x50] sm:$0xff]
    %v903 = vld [vmem:[#allocation3 + $0x58] sm:$0xff]
    %v904 = vld [vmem:[#allocation3 + $0x60] sm:$0xff]
    %v905 = vld [vmem:[#allocation3 + $0x68] sm:$0xff]
    %v906 = vld [vmem:[#allocation3 + $0x70] sm:$0xff]
    %v907 = vld [vmem:[#allocation3 + $0x78] sm:$0xff]
    %v908 = vld [vmem:[#allocation3 + $0x80] sm:$0xff]
    %v909 = vld [vmem:[#allocation3 + $0x88] sm:$0xff]
    %v928 = vunpack.c.l.b16 %v892
    %v929 = vunpack.c.h.b16 %v892
    %v930 = vunpack.c.l.b16 %v893
    %v931 = vunpack.c.h.b16 %v893
    %v932 = vunpack.c.l.b16 %v894
    %v933 = vunpack.c.h.b16 %v894
    %v934 = vunpack.c.l.b16 %v895
    %v935 = vunpack.c.h.b16 %v895
    %v936 = vunpack.c.l.b16 %v896
    %v937 = vunpack.c.h.b16 %v896
    %v938 = vunpack.c.l.b16 %v897
    %v939 = vunpack.c.h.b16 %v897
    %v940 = vunpack.c.l.b16 %v898
    %v941 = vunpack.c.h.b16 %v898
    %v942 = vunpack.c.l.b16 %v899
    %v943 = vunpack.c.h.b16 %v899
    %v944 = vunpack.c.l.b16 %v900
    %v945 = vunpack.c.h.b16 %v900
    %v946 = vunpack.c.l.b16 %v901
    %v947 = vunpack.c.h.b16 %v901
    %v948 = vunpack.c.l.b16 %v902
    %v949 = vunpack.c.h.b16 %v902
    %v950 = vunpack.c.l.b16 %v903
    %v951 = vunpack.c.h.b16 %v903
    %v952 = vunpack.c.l.b16 %v904
    %v953 = vunpack.c.h.b16 %v904
    %v954 = vunpack.c.l.b16 %v905
    %v955 = vunpack.c.h.b16 %v905
    %v956 = vunpack.c.l.b16 %v906
    %v957 = vunpack.c.h.b16 %v906
    %v958 = vunpack.c.l.b16 %v907
    %v959 = vunpack.c.h.b16 %v907
    %v960 = vunpack.c.l.b16 %v908
    %v961 = vunpack.c.h.b16 %v908
    %v962 = vunpack.c.l.b16 %v909
    %v963 = vunpack.c.h.b16 %v909
    %v964 = vpack.c.b16 %v932, %v928
    %v965 = vpack.c.b16 %v933, %v929
    %v966 = vpack.c.b16 %v934, %v930
    %v967 = vpack.c.b16 %v935, %v931
    %v968 = vpack.c.b16 %v940, %v936
    %v969 = vpack.c.b16 %v941, %v937
    %v970 = vpack.c.b16 %v942, %v938
    %v971 = vpack.c.b16 %v943, %v939
    %v972 = vpack.c.b16 %v948, %v944
    %v973 = vpack.c.b16 %v949, %v945
    %v974 = vpack.c.b16 %v950, %v946
    %v975 = vpack.c.b16 %v951, %v947
    %v976 = vpack.c.b16 %v956, %v952
    %v977 = vpack.c.b16 %v957, %v953
    %v978 = vpack.c.b16 %v958, %v954
    %v979 = vpack.c.b16 %v959, %v955
    %v980 = vpack.c.b16 %v960, %v960
    %v981 = vpack.c.b16 %v961, %v961
    %v982 = vpack.c.b16 %v962, %v962
    %v983 = vpack.c.b16 %v963, %v963
    %v1001 = vsel %vm502, %v891, 0
    %v1004 = vsel %vm506, %v980, 0
    %v1007 = vsel %vm506, %v981, 0
    %v1010 = vsel %vm506, %v982, 0
    %v1013 = vsel %vm506, %v983, 0
    %1015 = vmatpush.bf16.msra.mxu0 0
    %1016 = vmatpush.bf16.msra.mxu0 0
    %1017 = vmatpush.bf16.msra.mxu0 0
    %1018 = vmatpush.bf16.msra.mxu0 %v1004
    %1019 = vmatpush.bf16.msra.mxu0 %v976
    %1020 = vmatpush.bf16.msra.mxu0 %v972
    %1021 = vmatpush.bf16.msra.mxu0 %v968
    %1022 = vmatpush.bf16.msra.mxu0 %v964
    %1023 = vmatmul.bf16.gmra.mxu0 %v1001
    %v1024 = vpop.f32.mrf.mxu0
    %v1025 = vadd.f32 0.0, %v1024
    %v1026 = vpop.f32.mrf.mxu0
    %1027 = vdwg.mxu0
    %1028 = vmatpush.bf16.msra.mxu0 0
    %1029 = vmatpush.bf16.msra.mxu0 0
    %1030 = vmatpush.bf16.msra.mxu0 0
    %1031 = vmatpush.bf16.msra.mxu0 %v1007
    %1032 = vmatpush.bf16.msra.mxu0 %v977
    %1033 = vmatpush.bf16.msra.mxu0 %v973
    %1034 = vmatpush.bf16.msra.mxu0 %v969
    %1035 = vmatpush.bf16.msra.mxu0 %v965
    %1036 = vmatmul.bf16.gmra.mxu0 %v1001
    %v1037 = vpop.f32.mrf.mxu0
    %v1038 = vadd.f32 0.0, %v1037
    %v1039 = vpop.f32.mrf.mxu0
    %1040 = vdwg.mxu0
    %1041 = vmatpush.bf16.msra.mxu0 0
    %1042 = vmatpush.bf16.msra.mxu0 0
    %1043 = vmatpush.bf16.msra.mxu0 0
    %1044 = vmatpush.bf16.msra.mxu0 %v1010
    %1045 = vmatpush.bf16.msra.mxu0 %v978
    %1046 = vmatpush.bf16.msra.mxu0 %v974
    %1047 = vmatpush.bf16.msra.mxu0 %v970
    %1048 = vmatpush.bf16.msra.mxu0 %v966
    %1049 = vmatmul.bf16.gmra.mxu0 %v1001
    %v1050 = vpop.f32.mrf.mxu0
    %v1051 = vadd.f32 0.0, %v1050
    %v1052 = vpop.f32.mrf.mxu0
    %1053 = vdwg.mxu0
    %1054 = vmatpush.bf16.msra.mxu0 0
    %1055 = vmatpush.bf16.msra.mxu0 0
    %1056 = vmatpush.bf16.msra.mxu0 0
    %1057 = vmatpush.bf16.msra.mxu0 %v1013
    %1058 = vmatpush.bf16.msra.mxu0 %v979
    %1059 = vmatpush.bf16.msra.mxu0 %v975
    %1060 = vmatpush.bf16.msra.mxu0 %v971
    %1061 = vmatpush.bf16.msra.mxu0 %v967
    %1062 = vmatmul.bf16.gmra.mxu0 %v1001
    %v1063 = vpop.f32.mrf.mxu0
    %v1064 = vadd.f32 0.0, %v1063
    %v1065 = vpop.f32.mrf.mxu0
    %1066 = vdwg.mxu0
    %s1067 = scalar_lea.vmem [#allocation9], 32
    %1068 = vst [vmem:[%s1067] sm:$0xff] %v1025
    %1069 = vst [vmem:[%s1067 + $0x8] sm:$0xff] %v1038
    %1070 = vst [vmem:[%s1067 + $0x10] sm:$0xff] %v1051
    %1071 = vst [vmem:[%s1067 + $0x18] sm:$0xff] %v1064
    // Predicated region
    $region18: #{tpu_custom_call.1} parent=1 // pred_check
      _
    $region19: #{tpu_custom_call.1} parent=1 // pred_check_branch
      %1073 = sbr.rel (0) target = $region21
    $region20: #{tpu_custom_call.1} parent=1 // pred_region
      %1075 = vsyncadd [#allocation6], 0
      %s1076 = sshll.u32 [#allocation9], 4
      %s1077 = int_to_ptr.vmem [resolvable:$true] %s1076
      %s1078 = sshll.u32 %s2, 4
      %s1079 = int_to_ptr.hbm [resolvable:$true] %s1078
      %1084 = dma.vmem_to_hbm [thread:$0]  %s1077, 1024, %s1079, [#allocation6], 512, 512, 32
    $region21: #{tpu_custom_call.1} parent=1 // pred_fallthru
      _
    // Predicated region
    $region22: #{tpu_custom_call.1} parent=1 // pred_check
      _
    $region23: #{tpu_custom_call.1} parent=1 // pred_check_branch
      %1086 = sbr.rel (0) target = $region25
    $region24: #{tpu_custom_call.1} parent=1 // pred_region
      %1088 = dma.done [#allocation6], 1024
    $region25: #{tpu_custom_call.1} parent=1 // pred_fallthru
      _
    %1089 = vsyncpa [#allocation5], 1
    %1090 = vsyncpa [#allocation8], 1
    %1091 = vsyncpa [#allocation6], 1

</llo_original>
